<compile_context>
chip_gen: v5e
topology: v5e:2x2
jax: 0.10.0
libtpu: 0.0.40
codegen_flags: <defaults>
</compile_context>

<pallas_src>
import functools

import numpy as np
import jax
import jax.numpy as jnp
from jax.experimental import pallas as pl
from jax.experimental.pallas import tpu as pltpu

NTHETA = 400          # hard-coded in psf_model.__init__
LANE = 128            # lane granule for the streamed pixel axis


# ----------------------------------------------------------------------------
# Host-side precompute (glue) — mirrors psf_model.__init__ / init_psf_params
# ----------------------------------------------------------------------------
def _bessel_jn(n, x, n_quad=None):
    """J_n(x) = 1/(2*pi) * int_0^{2pi} cos(n*t - x*sin(t)) dt  (periodic trapezoid).
    Host-side replacement for scipy.special.jv (no scipy dependency)."""
    # TODO(synk): scipy.special.jv has no Pallas equivalent; it is __init__-time
    # precompute in the torch module anyway, so it stays on host.
    if n_quad is None:
        # resolve the integrand for the largest argument actually present
        n_quad = int(max(256, 64 + 8 * float(np.max(np.abs(x)))))
    acc = np.zeros_like(x, dtype=np.float64)
    for m in range(n_quad):
        t = 2.0 * np.pi * m / n_quad
        acc += np.cos(n * t - x * np.sin(t))
    return acc / n_quad


def _calculate_phi(npxls):
    N = (npxls - 1) / 2.0
    a = np.arange(-N, N + 1.0)
    X = np.tile(a[None, :], (npxls, 1))
    Y = np.tile(-a[:, None], (1, npxls))
    return np.arctan2(Y, X)


def _round_up(v, m):
    return ((v + m - 1) // m) * m


def build_psf_constants(NA, Rindex, lambda_, dx, dy, dz, Nx, Ny, Nz, Ntheta=NTHETA):
    assert Nx == Ny, "Nx != Ny -> Phi calculation wrong"
    alpha = np.arcsin(NA / Rindex)
    x = dx * np.arange(-Nx // 2 + 1, Nx // 2 + 1)
    y = dy * np.arange(-Ny // 2 + 1, Ny // 2 + 1)
    z = dz * np.arange(-Nz // 2 + 1, Nz // 2 + 1)
    dtheta = alpha / Ntheta
    theta = np.arange(Ntheta) * dtheta
    Phi = _calculate_phi(Nx)
    A = np.pi / lambda_
    X, Y, THETA = np.meshgrid(x, y, theta, indexing="ij")
    V = 2.0 * np.pi / lambda_ * np.sqrt(X ** 2 + Y ** 2)
    arg = V * np.sin(THETA)
    J0 = _bessel_jn(0, arg)
    J1 = _bessel_jn(1, arg)
    J2 = _bessel_jn(2, arg)
    ct, st = np.cos(THETA), np.sin(THETA)
    sq = np.sqrt(ct)
    Func0 = sq * st * (1.0 + ct) * J0
    Func1 = sq * st ** 2 * J1
    Func2 = sq * st * (1.0 - ct) * J2
    U = 2.0 * np.pi / lambda_ * z
    # trapezoid quadrature weights along theta (identical to torch.trapz(x=theta))
    d = np.diff(theta)
    w = np.zeros_like(theta)
    w[:-1] += 0.5 * d
    w[1:] += 0.5 * d

    # --- fold angular factors into the streamed constant (no in-kernel VPU work) ---
    M = Nx * Ny
    c2p = np.cos(2.0 * Phi)[:, :, None]
    s2p = np.sin(2.0 * Phi)[:, :, None]
    cp = np.cos(Phi)[:, :, None]
    FuncEx = Func0 + Func2 * c2p          # Ex integrand (before 1j*A)
    FuncEy = Func2 * s2p                  # Ey integrand (before 1j*A)
    FuncEz = -2.0 * Func1 * cp            # Ez integrand (before A)
    F = np.stack([FuncEx.reshape(M, Ntheta),
                  FuncEy.reshape(M, Ntheta),
                  FuncEz.reshape(M, Ntheta)], axis=0).reshape(3 * M, Ntheta)

    # Transposed layout: theta on sublanes (400 % 16 == 0 for bf16 -> no K pad),
    # pixel/component axis on lanes, padded to a multiple of 128 only.
    R = 3 * M
    R_pad = _round_up(R, LANE)
    F_T = np.zeros((Ntheta, R_pad), np.float32)
    F_T[:, :R] = F.T
    func_T = jnp.asarray(F_T, jnp.bfloat16)          # device-resident streamed constant

    return dict(Nx=Nx, Ny=Ny, Nz=Nz, Ntheta=Ntheta, A=A, theta=theta, U=U, w=w,
                Phi=Phi, Func0=Func0, Func1=Func1, Func2=Func2,
                func_T=func_T,
                ct_dev=jnp.asarray(np.cos(theta), jnp.float32),
                U_dev=jnp.asarray(U, jnp.float32),
                wA_dev=jnp.asarray(A * w, jnp.float32))


# ----------------------------------------------------------------------------
# Pallas kernel: one MXU matmul per column tile (trapz-over-theta = contraction)
# ----------------------------------------------------------------------------
def _psf_kernel(l_ref, f_ref, o_ref):
    # l_ref: (2*Nz, Ntheta) bf16 resident aberration matrix
    #        rows 0..Nz-1 = A*w*cos(phase), rows Nz..2Nz-1 = A*w*sin(phase)
    # f_ref: (Ntheta, tn)   bf16 streamed folded-Func tile (pixel axis on lanes)
    # o_ref: (2*Nz, tn)     f32 lane-dense output tile
    o_ref[...] = jnp.dot(l_ref[...], f_ref[...],
                         preferred_element_type=jnp.float32)


@functools.partial(jax.jit, static_argnames=("Nx", "Ny", "Nz", "tn_cap"))
def psf_forward(abberations, func_T, ct, U, wA, *, Nx, Ny, Nz, tn_cap=8192):
    Ntheta, R_pad = func_T.shape
    M = Nx * Ny
    R = 3 * M
    nrows = 2 * Nz

    # exp(1j*abbr)*exp(-1j*U_k*cos(theta)) == exp(i*(abbr(t) - U_k*cos(theta_t)))
    abbr = abberations.astype(jnp.float32)
    phase = abbr[None, :] - U[:, None] * ct[None, :]                 # (Nz, Ntheta)
    L = jnp.concatenate([wA[None, :] * jnp.cos(phase),
                         wA[None, :] * jnp.sin(phase)], axis=0)      # (2*Nz, Ntheta)
    L = L.astype(jnp.bfloat16)

    # Column tiling: big lane-dense tiles, but always >= 2 grid steps when the
    # problem allows it so the "parallel" axis lands work on both v7x cores.
    n_blocks = max(2, pl.cdiv(R_pad, tn_cap))
    tn = min(R_pad, _round_up(pl.cdiv(R_pad, n_blocks), LANE))
    grid = (pl.cdiv(R_pad, tn),)

    cost = pl.CostEstimate(
        flops=2 * nrows * Ntheta * R_pad,
        transcendentals=0,
        bytes_accessed=Ntheta * R_pad * 2 + nrows * Ntheta * 2 + nrows * R_pad * 4,
    )

    out = pl.pallas_call(
        _psf_kernel,
        out_shape=jax.ShapeDtypeStruct((nrows, R_pad), jnp.float32),
        grid_spec=pltpu.PrefetchScalarGridSpec(
            num_scalar_prefetch=0,
            grid=grid,
            in_specs=[pl.BlockSpec((nrows, Ntheta), lambda i: (0, 0)),   # resident LHS
                      pl.BlockSpec((Ntheta, tn), lambda i: (0, i))],     # streamed F
            out_specs=pl.BlockSpec((nrows, tn), lambda i: (0, i)),
        ),
        compiler_params=pltpu.CompilerParams(
            dimension_semantics=("parallel",),        # shards across v7x's 2 TCs
            vmem_limit_bytes=32 << 20),               # ~13.5 MiB/tile double-buffered
        cost_estimate=cost,
    )(L, func_T)

    # Cheap complex recombination: Ex, Ey carry the 1j factor; Ez does not
    # (its -2*A was folded into FuncEz; A is folded into wA).
    out = out[:, :R].reshape(2, Nz, 3, Nx, Ny)        # (re/im, z, comp, x, y)
    Ir, Ii = out[0], out[1]
    real = jnp.concatenate([-Ii[:, :2], Ir[:, 2:]], axis=1)
    imag = jnp.concatenate([Ir[:, :2], Ii[:, 2:]], axis=1)
    psf = (real + 1j * imag).astype(jnp.complex64)    # (Nz, 3, Nx, Ny)
    return jnp.transpose(psf, (1, 2, 3, 0))           # (3, Nx, Ny, Nz)


# ----------------------------------------------------------------------------
# Pure numpy (float64) reference mirroring psf_model.forward
# ----------------------------------------------------------------------------
def psf_reference(abberations, consts):
    Nx, Ny, Nz = consts["Nx"], consts["Ny"], consts["Nz"]
    A = consts["A"]
    theta, U, w, Phi = consts["theta"], consts["U"], consts["w"], consts["Phi"]
    abbr = np.asarray(abberations, np.float64)
    exp_ab = np.exp(1j * abbr)                        # (Ntheta,)
    ct = np.cos(theta)
    PSF = np.zeros((3, Nx, Ny, Nz), dtype=np.complex128)
    for k in range(Nz):
        f3 = np.exp(-1j * U[k] * ct)                  # (Ntheta,)
        wk = (exp_ab * f3 * w)[None, None, :]
        I0 = np.sum(consts["Func0"] * wk, axis=2)     # == trapz over theta
        I1 = np.sum(consts["Func1"] * wk, axis=2)
        I2 = np.sum(consts["Func2"] * wk, axis=2)
        PSF[0, :, :, k] = 1j * A * (I0 + I2 * np.cos(2 * Phi))
        PSF[1, :, :, k] = 1j * A * I2 * np.sin(2 * Phi)
        PSF[2, :, :, k] = -2 * A * I1 * np.cos(Phi)
    return PSF


if __name__ == "__main__":
    NA, Rindex, lambda_ = 0.8, 1.33, 0.532
    dx = dy = 0.1
    dz = 0.2
    Nx = Ny = 16
    Nz = 8

    consts = build_psf_constants(NA, Rindex, lambda_, dx, dy, dz, Nx, Ny, Nz)

    # Module parameter (nn.Parameter of shape (400,), zeros at __init__).
    # Deterministic small non-zero values so the exp(1j*abberations) path is exercised.
    key = jax.random.PRNGKey(0)
    abberations = 0.05 * jax.random.normal(key, (NTHETA,), dtype=jnp.float32)

    psf = jax.block_until_ready(
        psf_forward(abberations, consts["func_T"], consts["ct_dev"],
                    consts["U_dev"], consts["wA_dev"], Nx=Nx, Ny=Ny, Nz=Nz))
    assert psf.shape == (3, Nx, Ny, Nz), psf.shape
    assert psf.dtype == jnp.complex64, psf.dtype

    ref = psf_reference(np.asarray(abberations), consts)
    # Loose-ish tolerance: kernel streams bf16 operands with f32 MXU accumulation,
    # reference is f64.
    np.testing.assert_allclose(np.asarray(psf), ref, rtol=2e-2, atol=5e-2)

    print("KERNEL_OK")
</pallas_src>

<mosaic_0001>
module attributes {stable_mosaic.version = 11 : i64} {
  func.func @_psf_kernel(%arg0: i32, %arg1: memref<16x400xbf16, #tpu.memory_space<vmem>>, %arg2: memref<400x384xbf16, #tpu.memory_space<vmem>>, %arg3: memref<16x384xf32, #tpu.memory_space<vmem>>) attributes {dimension_semantics = [#tpu.dimension_semantics<parallel>], iteration_bounds = array<i64: 2>, scalar_prefetch = 0 : i64, scratch_operands = 0 : i64, tpu.core_type = #tpu.core_type<tc>, window_params = [{pipeline_mode = #tpu.pipeline_mode<synchronous>, transform_indices = @transform_0, window_bounds = array<i64: 16, 400>}, {transform_indices = @transform_1, window_bounds = array<i64: 400, 384>}, {transform_indices = @transform_2, window_bounds = array<i64: 16, 384>}]} {
    %c0 = arith.constant 0 : index
    %c0_0 = arith.constant 0 : index
    %0 = vector.load %arg1[%c0, %c0_0] : memref<16x400xbf16, #tpu.memory_space<vmem>>, vector<16x400xbf16>
    %c0_1 = arith.constant 0 : index
    %c0_2 = arith.constant 0 : index
    %1 = vector.load %arg2[%c0_1, %c0_2] : memref<400x384xbf16, #tpu.memory_space<vmem>>, vector<400x384xbf16>
    %cst = arith.constant dense<0.000000e+00> : vector<16x384xf32>
    %2 = tpu.matmul %0, %1, %cst {dimension_numbers = #tpu.dot_dimension_numbers<[1], [0], [0], [1], [0, 0, 1, 1], [], []>} : vector<16x400xbf16>, vector<400x384xbf16>, vector<16x384xf32> -> vector<16x384xf32>
    %c0_3 = arith.constant 0 : index
    %c0_4 = arith.constant 0 : index
    %3 = vector.load %arg3[%c0_3, %c0_4] : memref<16x384xf32, #tpu.memory_space<vmem>>, vector<16x384xf32>
    tpu.vector_store %arg3[%c0_3, %c0_4], %2 {strides = array<i32>} : memref<16x384xf32, #tpu.memory_space<vmem>>, vector<16x384xf32>,
    return
  }
  func.func @transform_0(%arg0: i32) -> (i32, i32) {
    %c0_i32 = arith.constant 0 : i32
    %c0_i32_0 = arith.constant 0 : i32
    %c0_i32_1 = arith.constant 0 : i32
    return %c0_i32, %c0_i32_0 : i32, i32
  }
  func.func @transform_1(%arg0: i32) -> (i32, i32) {
    %c0_i32 = arith.constant 0 : i32
    %c0_i32_0 = arith.constant 0 : i32
    return %c0_i32, %arg0 : i32, i32
  }
  func.func @transform_2(%arg0: i32) -> (i32, i32) {
    %c0_i32 = arith.constant 0 : i32
    %c0_i32_0 = arith.constant 0 : i32
    return %c0_i32, %arg0 : i32, i32
  }
}

</mosaic_0001>

<llo_original>
// kernel: squeeze.2
$region0: #{squeeze.2}
  %s0 = inlined_call_operand.vmem [shape: f32[8,768], index: 0, kind: input, shape index: {}]
  %s1 = inlined_call_operand.vmem [shape: f32[8,3,16,16], index: 1, kind: output, shape index: {}]
  %v2 = vld [vmem:[%s0] sm:$0xff]
  %vm3 = vcmask 130048
  %4 = vst.msk [vmem:[%s1] ss:$48 sm:$0x3] %vm3, %v2
  %5 = vst.msk [vmem:[%s1] ss:$48 sm:$0xc] %vm3, %v2
  %6 = vst.msk [vmem:[%s1] ss:$48 sm:$0x30] %vm3, %v2
  %7 = vst.msk [vmem:[%s1] ss:$48 sm:$0xc0] %vm3, %v2
  %s8 = scalar_lea.vmem %s0, 8
  %v9 = vld [vmem:[%s8] sm:$0xff]
  %vm10 = vcmask 130048
  %s11 = scalar_lea.vmem %s1, 8
  %12 = vst.msk [vmem:[%s11] ss:$48 sm:$0x3] %vm10, %v9
  %s13 = scalar_lea.vmem %s1, 8
  %14 = vst.msk [vmem:[%s13] ss:$48 sm:$0xc] %vm10, %v9
  %s15 = scalar_lea.vmem %s1, 8
  %16 = vst.msk [vmem:[%s15] ss:$48 sm:$0x30] %vm10, %v9
  %s17 = scalar_lea.vmem %s1, 8
  %18 = vst.msk [vmem:[%s17] ss:$48 sm:$0xc0] %vm10, %v9
  %s19 = scalar_lea.vmem %s0, 16
  %v20 = vld [vmem:[%s19] sm:$0xff]
  %vm21 = vcmask 130048
  %s22 = scalar_lea.vmem %s1, 16
  %23 = vst.msk [vmem:[%s22] ss:$48 sm:$0x3] %vm21, %v20
  %s24 = scalar_lea.vmem %s1, 16
  %25 = vst.msk [vmem:[%s24] ss:$48 sm:$0xc] %vm21, %v20
  %s26 = scalar_lea.vmem %s1, 16
  %27 = vst.msk [vmem:[%s26] ss:$48 sm:$0x30] %vm21, %v20
  %s28 = scalar_lea.vmem %s1, 16
  %29 = vst.msk [vmem:[%s28] ss:$48 sm:$0xc0] %vm21, %v20
  %s30 = scalar_lea.vmem %s0, 24
  %v31 = vld [vmem:[%s30] sm:$0xff]
  %vm32 = vcmask 130048
  %s33 = scalar_lea.vmem %s1, 24
  %34 = vst.msk [vmem:[%s33] ss:$48 sm:$0x3] %vm32, %v31
  %s35 = scalar_lea.vmem %s1, 24
  %36 = vst.msk [vmem:[%s35] ss:$48 sm:$0xc] %vm32, %v31
  %s37 = scalar_lea.vmem %s1, 24
  %38 = vst.msk [vmem:[%s37] ss:$48 sm:$0x30] %vm32, %v31
  %s39 = scalar_lea.vmem %s1, 24
  %40 = vst.msk [vmem:[%s39] ss:$48 sm:$0xc0] %vm32, %v31
  %s41 = scalar_lea.vmem %s0, 32
  %v42 = vld [vmem:[%s41] sm:$0xff]
  %vm43 = vcmask 130048
  %s44 = scalar_lea.vmem %s1, 32
  %45 = vst.msk [vmem:[%s44] ss:$48 sm:$0x3] %vm43, %v42
  %s46 = scalar_lea.vmem %s1, 32
  %47 = vst.msk [vmem:[%s46] ss:$48 sm:$0xc] %vm43, %v42
  %s48 = scalar_lea.vmem %s1, 32
  %49 = vst.msk [vmem:[%s48] ss:$48 sm:$0x30] %vm43, %v42
  %s50 = scalar_lea.vmem %s1, 32
  %51 = vst.msk [vmem:[%s50] ss:$48 sm:$0xc0] %vm43, %v42
  %s52 = scalar_lea.vmem %s0, 40
  %v53 = vld [vmem:[%s52] sm:$0xff]
  %vm54 = vcmask 130048
  %s55 = scalar_lea.vmem %s1, 40
  %56 = vst.msk [vmem:[%s55] ss:$48 sm:$0x3] %vm54, %v53
  %s57 = scalar_lea.vmem %s1, 40
  %58 = vst.msk [vmem:[%s57] ss:$48 sm:$0xc] %vm54, %v53
  %s59 = scalar_lea.vmem %s1, 40
  %60 = vst.msk [vmem:[%s59] ss:$48 sm:$0x30] %vm54, %v53
  %s61 = scalar_lea.vmem %s1, 40
  %62 = vst.msk [vmem:[%s61] ss:$48 sm:$0xc0] %vm54, %v53
  %v63 = vld.sshfl [vmem:[%s0] sm:$0xff pattern:$0xb3a29180]
  %64 = vrot.lane.b32.xlu0 %v63, 112
  %v65 = vpop.permute.xlu0 %64
  %vm66 = vcmask 130048
  %s67 = scalar_lea.vmem %s1, 1
  %68 = vst.msk [vmem:[%s67] ss:$8 sm:$0x3] %vm66, %v65
  %s69 = scalar_lea.vmem %s1, 33
  %70 = vst.msk [vmem:[%s69] ss:$8 sm:$0xc] %vm66, %v65
  %s71 = scalar_lea.vmem %s1, 65
  %72 = vst.msk [vmem:[%s71] ss:$8 sm:$0x30] %vm66, %v65
  %s73 = scalar_lea.vmem %s1, 97
  %74 = vst.msk [vmem:[%s73] ss:$8 sm:$0xc0] %vm66, %v65
  %s75 = scalar_lea.vmem %s0, 4
  %v76 = vld.sshfl [vmem:[%s75] sm:$0xff pattern:$0xb3a29180]
  %77 = vrot.lane.b32.xlu0 %v76, 112
  %v78 = vpop.permute.xlu0 %77
  %vm79 = vcmask 130048
  %s80 = scalar_lea.vmem %s1, 193
  %81 = vst.msk [vmem:[%s80] ss:$8 sm:$0x3] %vm79, %v78
  %s82 = scalar_lea.vmem %s1, 225
  %83 = vst.msk [vmem:[%s82] ss:$8 sm:$0xc] %vm79, %v78
  %s84 = scalar_lea.vmem %s1, 257
  %85 = vst.msk [vmem:[%s84] ss:$8 sm:$0x30] %vm79, %v78
  %s86 = scalar_lea.vmem %s1, 289
  %87 = vst.msk [vmem:[%s86] ss:$8 sm:$0xc0] %vm79, %v78
  %s88 = scalar_lea.vmem %s0, 16
  %v89 = vld.sshfl [vmem:[%s88] sm:$0xff pattern:$0xa2b38091]
  %90 = vrot.lane.b32.xlu0 %v89, 112
  %v91 = vpop.permute.xlu0 %90
  %vm92 = vcmask 130048
  %s93 = scalar_lea.vmem %s1, 65
  %94 = vst.msk [vmem:[%s93] ss:$8 sm:$0x3] %vm92, %v91
  %s95 = scalar_lea.vmem %s1, 1
  %96 = vst.msk [vmem:[%s95] ss:$8 sm:$0xc] %vm92, %v91
  %s97 = scalar_lea.vmem %s1, 129
  %98 = vst.msk [vmem:[%s97] ss:$8 sm:$0x30] %vm92, %v91
  %s99 = scalar_lea.vmem %s1, 65
  %100 = vst.msk [vmem:[%s99] ss:$8 sm:$0xc0] %vm92, %v91
  %s101 = scalar_lea.vmem %s0, 20
  %v102 = vld.sshfl [vmem:[%s101] sm:$0xff pattern:$0xa2b38091]
  %103 = vrot.lane.b32.xlu0 %v102, 112
  %v104 = vpop.permute.xlu0 %103
  %vm105 = vcmask 130048
  %s106 = scalar_lea.vmem %s1, 257
  %107 = vst.msk [vmem:[%s106] ss:$8 sm:$0x3] %vm105, %v104
  %s108 = scalar_lea.vmem %s1, 193
  %109 = vst.msk [vmem:[%s108] ss:$8 sm:$0xc] %vm105, %v104
  %s110 = scalar_lea.vmem %s1, 321
  %111 = vst.msk [vmem:[%s110] ss:$8 sm:$0x30] %vm105, %v104
  %s112 = scalar_lea.vmem %s1, 257
  %113 = vst.msk [vmem:[%s112] ss:$8 sm:$0xc0] %vm105, %v104
  %s114 = scalar_lea.vmem %s0, 32
  %v115 = vld.sshfl [vmem:[%s114] sm:$0xff pattern:$0xb3a29180]
  %116 = vrot.lane.b32.xlu0 %v115, 112
  %v117 = vpop.permute.xlu0 %116
  %vm118 = vcmask 130048
  %s119 = scalar_lea.vmem %s1, 33
  %120 = vst.msk [vmem:[%s119] ss:$8 sm:$0x3] %vm118, %v117
  %s121 = scalar_lea.vmem %s1, 65
  %122 = vst.msk [vmem:[%s121] ss:$8 sm:$0xc] %vm118, %v117
  %s123 = scalar_lea.vmem %s1, 97
  %124 = vst.msk [vmem:[%s123] ss:$8 sm:$0x30] %vm118, %v117
  %s125 = scalar_lea.vmem %s1, 129
  %126 = vst.msk [vmem:[%s125] ss:$8 sm:$0xc0] %vm118, %v117
  %s127 = scalar_lea.vmem %s0, 36
  %v128 = vld.sshfl [vmem:[%s127] sm:$0xff pattern:$0xb3a29180]
  %129 = vrot.lane.b32.xlu0 %v128, 112
  %v130 = vpop.permute.xlu0 %129
  %vm131 = vcmask 130048
  %s132 = scalar_lea.vmem %s1, 225
  %133 = vst.msk [vmem:[%s132] ss:$8 sm:$0x3] %vm131, %v130
  %s134 = scalar_lea.vmem %s1, 257
  %135 = vst.msk [vmem:[%s134] ss:$8 sm:$0xc] %vm131, %v130
  %s136 = scalar_lea.vmem %s1, 289
  %137 = vst.msk [vmem:[%s136] ss:$8 sm:$0x30] %vm131, %v130
  %s138 = scalar_lea.vmem %s1, 321
  %139 = vst.msk [vmem:[%s138] ss:$8 sm:$0xc0] %vm131, %v130
  %v140 = vld.sshfl [vmem:[%s0] sm:$0xff pattern:$0xb3a29180]
  %141 = vrot.lane.b32.xlu0 %v140, 96
  %v142 = vpop.permute.xlu0 %141
  %vm143 = vcmask 130048
  %s144 = scalar_lea.vmem %s1, 2
  %145 = vst.msk [vmem:[%s144] ss:$8 sm:$0x3] %vm143, %v142
  %s146 = scalar_lea.vmem %s1, 34
  %147 = vst.msk [vmem:[%s146] ss:$8 sm:$0xc] %vm143, %v142
  %s148 = scalar_lea.vmem %s1, 66
  %149 = vst.msk [vmem:[%s148] ss:$8 sm:$0x30] %vm143, %v142
  %s150 = scalar_lea.vmem %s1, 98
  %151 = vst.msk [vmem:[%s150] ss:$8 sm:$0xc0] %vm143, %v142
  %s152 = scalar_lea.vmem %s0, 4
  %v153 = vld.sshfl [vmem:[%s152] sm:$0xff pattern:$0xb3a29180]
  %154 = vrot.lane.b32.xlu0 %v153, 96
  %v155 = vpop.permute.xlu0 %154
  %vm156 = vcmask 130048
  %s157 = scalar_lea.vmem %s1, 194
  %158 = vst.msk [vmem:[%s157] ss:$8 sm:$0x3] %vm156, %v155
  %s159 = scalar_lea.vmem %s1, 226
  %160 = vst.msk [vmem:[%s159] ss:$8 sm:$0xc] %vm156, %v155
  %s161 = scalar_lea.vmem %s1, 258
  %162 = vst.msk [vmem:[%s161] ss:$8 sm:$0x30] %vm156, %v155
  %s163 = scalar_lea.vmem %s1, 290
  %164 = vst.msk [vmem:[%s163] ss:$8 sm:$0xc0] %vm156, %v155
  %s165 = scalar_lea.vmem %s0, 16
  %v166 = vld.sshfl [vmem:[%s165] sm:$0xff pattern:$0xa2b38091]
  %167 = vrot.lane.b32.xlu0 %v166, 96
  %v168 = vpop.permute.xlu0 %167
  %vm169 = vcmask 130048
  %s170 = scalar_lea.vmem %s1, 66
  %171 = vst.msk [vmem:[%s170] ss:$8 sm:$0x3] %vm169, %v168
  %s172 = scalar_lea.vmem %s1, 2
  %173 = vst.msk [vmem:[%s172] ss:$8 sm:$0xc] %vm169, %v168
  %s174 = scalar_lea.vmem %s1, 130
  %175 = vst.msk [vmem:[%s174] ss:$8 sm:$0x30] %vm169, %v168
  %s176 = scalar_lea.vmem %s1, 66
  %177 = vst.msk [vmem:[%s176] ss:$8 sm:$0xc0] %vm169, %v168
  %s178 = scalar_lea.vmem %s0, 20
  %v179 = vld.sshfl [vmem:[%s178] sm:$0xff pattern:$0xa2b38091]
  %180 = vrot.lane.b32.xlu0 %v179, 96
  %v181 = vpop.permute.xlu0 %180
  %vm182 = vcmask 130048
  %s183 = scalar_lea.vmem %s1, 258
  %184 = vst.msk [vmem:[%s183] ss:$8 sm:$0x3] %vm182, %v181
  %s185 = scalar_lea.vmem %s1, 194
  %186 = vst.msk [vmem:[%s185] ss:$8 sm:$0xc] %vm182, %v181
  %s187 = scalar_lea.vmem %s1, 322
  %188 = vst.msk [vmem:[%s187] ss:$8 sm:$0x30] %vm182, %v181
  %s189 = scalar_lea.vmem %s1, 258
  %190 = vst.msk [vmem:[%s189] ss:$8 sm:$0xc0] %vm182, %v181
  %s191 = scalar_lea.vmem %s0, 32
  %v192 = vld.sshfl [vmem:[%s191] sm:$0xff pattern:$0xb3a29180]
  %193 = vrot.lane.b32.xlu0 %v192, 96
  %v194 = vpop.permute.xlu0 %193
  %vm195 = vcmask 130048
  %s196 = scalar_lea.vmem %s1, 34
  %197 = vst.msk [vmem:[%s196] ss:$8 sm:$0x3] %vm195, %v194
  %s198 = scalar_lea.vmem %s1, 66
  %199 = vst.msk [vmem:[%s198] ss:$8 sm:$0xc] %vm195, %v194
  %s200 = scalar_lea.vmem %s1, 98
  %201 = vst.msk [vmem:[%s200] ss:$8 sm:$0x30] %vm195, %v194
  %s202 = scalar_lea.vmem %s1, 130
  %203 = vst.msk [vmem:[%s202] ss:$8 sm:$0xc0] %vm195, %v194
  %s204 = scalar_lea.vmem %s0, 36
  %v205 = vld.sshfl [vmem:[%s204] sm:$0xff pattern:$0xb3a29180]
  %206 = vrot.lane.b32.xlu0 %v205, 96
  %v207 = vpop.permute.xlu0 %206
  %vm208 = vcmask 130048
  %s209 = scalar_lea.vmem %s1, 226
  %210 = vst.msk [vmem:[%s209] ss:$8 sm:$0x3] %vm208, %v207
  %s211 = scalar_lea.vmem %s1, 258
  %212 = vst.msk [vmem:[%s211] ss:$8 sm:$0xc] %vm208, %v207
  %s213 = scalar_lea.vmem %s1, 290
  %214 = vst.msk [vmem:[%s213] ss:$8 sm:$0x30] %vm208, %v207
  %s215 = scalar_lea.vmem %s1, 322
  %216 = vst.msk [vmem:[%s215] ss:$8 sm:$0xc0] %vm208, %v207
  %v217 = vld.sshfl [vmem:[%s0] sm:$0xff pattern:$0xb3a29180]
  %218 = vrot.lane.b32.xlu0 %v217, 80
  %v219 = vpop.permute.xlu0 %218
  %vm220 = vcmask 130048
  %s221 = scalar_lea.vmem %s1, 3
  %222 = vst.msk [vmem:[%s221] ss:$8 sm:$0x3] %vm220, %v219
  %s223 = scalar_lea.vmem %s1, 35
  %224 = vst.msk [vmem:[%s223] ss:$8 sm:$0xc] %vm220, %v219
  %s225 = scalar_lea.vmem %s1, 67
  %226 = vst.msk [vmem:[%s225] ss:$8 sm:$0x30] %vm220, %v219
  %s227 = scalar_lea.vmem %s1, 99
  %228 = vst.msk [vmem:[%s227] ss:$8 sm:$0xc0] %vm220, %v219
  %s229 = scalar_lea.vmem %s0, 4
  %v230 = vld.sshfl [vmem:[%s229] sm:$0xff pattern:$0xb3a29180]
  %231 = vrot.lane.b32.xlu0 %v230, 80
  %v232 = vpop.permute.xlu0 %231
  %vm233 = vcmask 130048
  %s234 = scalar_lea.vmem %s1, 195
  %235 = vst.msk [vmem:[%s234] ss:$8 sm:$0x3] %vm233, %v232
  %s236 = scalar_lea.vmem %s1, 227
  %237 = vst.msk [vmem:[%s236] ss:$8 sm:$0xc] %vm233, %v232
  %s238 = scalar_lea.vmem %s1, 259
  %239 = vst.msk [vmem:[%s238] ss:$8 sm:$0x30] %vm233, %v232
  %s240 = scalar_lea.vmem %s1, 291
  %241 = vst.msk [vmem:[%s240] ss:$8 sm:$0xc0] %vm233, %v232
  %s242 = scalar_lea.vmem %s0, 16
  %v243 = vld.sshfl [vmem:[%s242] sm:$0xff pattern:$0xa2b38091]
  %244 = vrot.lane.b32.xlu0 %v243, 80
  %v245 = vpop.permute.xlu0 %244
  %vm246 = vcmask 130048
  %s247 = scalar_lea.vmem %s1, 67
  %248 = vst.msk [vmem:[%s247] ss:$8 sm:$0x3] %vm246, %v245
  %s249 = scalar_lea.vmem %s1, 3
  %250 = vst.msk [vmem:[%s249] ss:$8 sm:$0xc] %vm246, %v245
  %s251 = scalar_lea.vmem %s1, 131
  %252 = vst.msk [vmem:[%s251] ss:$8 sm:$0x30] %vm246, %v245
  %s253 = scalar_lea.vmem %s1, 67
  %254 = vst.msk [vmem:[%s253] ss:$8 sm:$0xc0] %vm246, %v245
  %s255 = scalar_lea.vmem %s0, 20
  %v256 = vld.sshfl [vmem:[%s255] sm:$0xff pattern:$0xa2b38091]
  %257 = vrot.lane.b32.xlu0 %v256, 80
  %v258 = vpop.permute.xlu0 %257
  %vm259 = vcmask 130048
  %s260 = scalar_lea.vmem %s1, 259
  %261 = vst.msk [vmem:[%s260] ss:$8 sm:$0x3] %vm259, %v258
  %s262 = scalar_lea.vmem %s1, 195
  %263 = vst.msk [vmem:[%s262] ss:$8 sm:$0xc] %vm259, %v258
  %s264 = scalar_lea.vmem %s1, 323
  %265 = vst.msk [vmem:[%s264] ss:$8 sm:$0x30] %vm259, %v258
  %s266 = scalar_lea.vmem %s1, 259
  %267 = vst.msk [vmem:[%s266] ss:$8 sm:$0xc0] %vm259, %v258
  %s268 = scalar_lea.vmem %s0, 32
  %v269 = vld.sshfl [vmem:[%s268] sm:$0xff pattern:$0xb3a29180]
  %270 = vrot.lane.b32.xlu0 %v269, 80
  %v271 = vpop.permute.xlu0 %270
  %vm272 = vcmask 130048
  %s273 = scalar_lea.vmem %s1, 35
  %274 = vst.msk [vmem:[%s273] ss:$8 sm:$0x3] %vm272, %v271
  %s275 = scalar_lea.vmem %s1, 67
  %276 = vst.msk [vmem:[%s275] ss:$8 sm:$0xc] %vm272, %v271
  %s277 = scalar_lea.vmem %s1, 99
  %278 = vst.msk [vmem:[%s277] ss:$8 sm:$0x30] %vm272, %v271
  %s279 = scalar_lea.vmem %s1, 131
  %280 = vst.msk [vmem:[%s279] ss:$8 sm:$0xc0] %vm272, %v271
  %s281 = scalar_lea.vmem %s0, 36
  %v282 = vld.sshfl [vmem:[%s281] sm:$0xff pattern:$0xb3a29180]
  %283 = vrot.lane.b32.xlu0 %v282, 80
  %v284 = vpop.permute.xlu0 %283
  %vm285 = vcmask 130048
  %s286 = scalar_lea.vmem %s1, 227
  %287 = vst.msk [vmem:[%s286] ss:$8 sm:$0x3] %vm285, %v284
  %s288 = scalar_lea.vmem %s1, 259
  %289 = vst.msk [vmem:[%s288] ss:$8 sm:$0xc] %vm285, %v284
  %s290 = scalar_lea.vmem %s1, 291
  %291 = vst.msk [vmem:[%s290] ss:$8 sm:$0x30] %vm285, %v284
  %s292 = scalar_lea.vmem %s1, 323
  %293 = vst.msk [vmem:[%s292] ss:$8 sm:$0xc0] %vm285, %v284
  %v294 = vld.sshfl [vmem:[%s0] sm:$0xff pattern:$0xb3a29180]
  %295 = vrot.lane.b32.xlu0 %v294, 64
  %v296 = vpop.permute.xlu0 %295
  %vm297 = vcmask 130048
  %s298 = scalar_lea.vmem %s1, 4
  %299 = vst.msk [vmem:[%s298] ss:$8 sm:$0x3] %vm297, %v296
  %s300 = scalar_lea.vmem %s1, 36
  %301 = vst.msk [vmem:[%s300] ss:$8 sm:$0xc] %vm297, %v296
  %s302 = scalar_lea.vmem %s1, 68
  %303 = vst.msk [vmem:[%s302] ss:$8 sm:$0x30] %vm297, %v296
  %s304 = scalar_lea.vmem %s1, 100
  %305 = vst.msk [vmem:[%s304] ss:$8 sm:$0xc0] %vm297, %v296
  %s306 = scalar_lea.vmem %s0, 4
  %v307 = vld.sshfl [vmem:[%s306] sm:$0xff pattern:$0xb3a29180]
  %308 = vrot.lane.b32.xlu0 %v307, 64
  %v309 = vpop.permute.xlu0 %308
  %vm310 = vcmask 130048
  %s311 = scalar_lea.vmem %s1, 196
  %312 = vst.msk [vmem:[%s311] ss:$8 sm:$0x3] %vm310, %v309
  %s313 = scalar_lea.vmem %s1, 228
  %314 = vst.msk [vmem:[%s313] ss:$8 sm:$0xc] %vm310, %v309
  %s315 = scalar_lea.vmem %s1, 260
  %316 = vst.msk [vmem:[%s315] ss:$8 sm:$0x30] %vm310, %v309
  %s317 = scalar_lea.vmem %s1, 292
  %318 = vst.msk [vmem:[%s317] ss:$8 sm:$0xc0] %vm310, %v309
  %s319 = scalar_lea.vmem %s0, 16
  %v320 = vld.sshfl [vmem:[%s319] sm:$0xff pattern:$0xa2b38091]
  %321 = vrot.lane.b32.xlu0 %v320, 64
  %v322 = vpop.permute.xlu0 %321
  %vm323 = vcmask 130048
  %s324 = scalar_lea.vmem %s1, 68
  %325 = vst.msk [vmem:[%s324] ss:$8 sm:$0x3] %vm323, %v322
  %s326 = scalar_lea.vmem %s1, 4
  %327 = vst.msk [vmem:[%s326] ss:$8 sm:$0xc] %vm323, %v322
  %s328 = scalar_lea.vmem %s1, 132
  %329 = vst.msk [vmem:[%s328] ss:$8 sm:$0x30] %vm323, %v322
  %s330 = scalar_lea.vmem %s1, 68
  %331 = vst.msk [vmem:[%s330] ss:$8 sm:$0xc0] %vm323, %v322
  %s332 = scalar_lea.vmem %s0, 20
  %v333 = vld.sshfl [vmem:[%s332] sm:$0xff pattern:$0xa2b38091]
  %334 = vrot.lane.b32.xlu0 %v333, 64
  %v335 = vpop.permute.xlu0 %334
  %vm336 = vcmask 130048
  %s337 = scalar_lea.vmem %s1, 260
  %338 = vst.msk [vmem:[%s337] ss:$8 sm:$0x3] %vm336, %v335
  %s339 = scalar_lea.vmem %s1, 196
  %340 = vst.msk [vmem:[%s339] ss:$8 sm:$0xc] %vm336, %v335
  %s341 = scalar_lea.vmem %s1, 324
  %342 = vst.msk [vmem:[%s341] ss:$8 sm:$0x30] %vm336, %v335
  %s343 = scalar_lea.vmem %s1, 260
  %344 = vst.msk [vmem:[%s343] ss:$8 sm:$0xc0] %vm336, %v335
  %s345 = scalar_lea.vmem %s0, 32
  %v346 = vld.sshfl [vmem:[%s345] sm:$0xff pattern:$0xb3a29180]
  %347 = vrot.lane.b32.xlu0 %v346, 64
  %v348 = vpop.permute.xlu0 %347
  %vm349 = vcmask 130048
  %s350 = scalar_lea.vmem %s1, 36
  %351 = vst.msk [vmem:[%s350] ss:$8 sm:$0x3] %vm349, %v348
  %s352 = scalar_lea.vmem %s1, 68
  %353 = vst.msk [vmem:[%s352] ss:$8 sm:$0xc] %vm349, %v348
  %s354 = scalar_lea.vmem %s1, 100
  %355 = vst.msk [vmem:[%s354] ss:$8 sm:$0x30] %vm349, %v348
  %s356 = scalar_lea.vmem %s1, 132
  %357 = vst.msk [vmem:[%s356] ss:$8 sm:$0xc0] %vm349, %v348
  %s358 = scalar_lea.vmem %s0, 36
  %v359 = vld.sshfl [vmem:[%s358] sm:$0xff pattern:$0xb3a29180]
  %360 = vrot.lane.b32.xlu0 %v359, 64
  %v361 = vpop.permute.xlu0 %360
  %vm362 = vcmask 130048
  %s363 = scalar_lea.vmem %s1, 228
  %364 = vst.msk [vmem:[%s363] ss:$8 sm:$0x3] %vm362, %v361
  %s365 = scalar_lea.vmem %s1, 260
  %366 = vst.msk [vmem:[%s365] ss:$8 sm:$0xc] %vm362, %v361
  %s367 = scalar_lea.vmem %s1, 292
  %368 = vst.msk [vmem:[%s367] ss:$8 sm:$0x30] %vm362, %v361
  %s369 = scalar_lea.vmem %s1, 324
  %370 = vst.msk [vmem:[%s369] ss:$8 sm:$0xc0] %vm362, %v361
  %v371 = vld.sshfl [vmem:[%s0] sm:$0xff pattern:$0xb3a29180]
  %372 = vrot.lane.b32.xlu0 %v371, 48
  %v373 = vpop.permute.xlu0 %372
  %vm374 = vcmask 130048
  %s375 = scalar_lea.vmem %s1, 5
  %376 = vst.msk [vmem:[%s375] ss:$8 sm:$0x3] %vm374, %v373
  %s377 = scalar_lea.vmem %s1, 37
  %378 = vst.msk [vmem:[%s377] ss:$8 sm:$0xc] %vm374, %v373
  %s379 = scalar_lea.vmem %s1, 69
  %380 = vst.msk [vmem:[%s379] ss:$8 sm:$0x30] %vm374, %v373
  %s381 = scalar_lea.vmem %s1, 101
  %382 = vst.msk [vmem:[%s381] ss:$8 sm:$0xc0] %vm374, %v373
  %s383 = scalar_lea.vmem %s0, 4
  %v384 = vld.sshfl [vmem:[%s383] sm:$0xff pattern:$0xb3a29180]
  %385 = vrot.lane.b32.xlu0 %v384, 48
  %v386 = vpop.permute.xlu0 %385
  %vm387 = vcmask 130048
  %s388 = scalar_lea.vmem %s1, 197
  %389 = vst.msk [vmem:[%s388] ss:$8 sm:$0x3] %vm387, %v386
  %s390 = scalar_lea.vmem %s1, 229
  %391 = vst.msk [vmem:[%s390] ss:$8 sm:$0xc] %vm387, %v386
  %s392 = scalar_lea.vmem %s1, 261
  %393 = vst.msk [vmem:[%s392] ss:$8 sm:$0x30] %vm387, %v386
  %s394 = scalar_lea.vmem %s1, 293
  %395 = vst.msk [vmem:[%s394] ss:$8 sm:$0xc0] %vm387, %v386
  %s396 = scalar_lea.vmem %s0, 16
  %v397 = vld.sshfl [vmem:[%s396] sm:$0xff pattern:$0xa2b38091]
  %398 = vrot.lane.b32.xlu0 %v397, 48
  %v399 = vpop.permute.xlu0 %398
  %vm400 = vcmask 130048
  %s401 = scalar_lea.vmem %s1, 69
  %402 = vst.msk [vmem:[%s401] ss:$8 sm:$0x3] %vm400, %v399
  %s403 = scalar_lea.vmem %s1, 5
  %404 = vst.msk [vmem:[%s403] ss:$8 sm:$0xc] %vm400, %v399
  %s405 = scalar_lea.vmem %s1, 133
  %406 = vst.msk [vmem:[%s405] ss:$8 sm:$0x30] %vm400, %v399
  %s407 = scalar_lea.vmem %s1, 69
  %408 = vst.msk [vmem:[%s407] ss:$8 sm:$0xc0] %vm400, %v399
  %s409 = scalar_lea.vmem %s0, 20
  %v410 = vld.sshfl [vmem:[%s409] sm:$0xff pattern:$0xa2b38091]
  %411 = vrot.lane.b32.xlu0 %v410, 48
  %v412 = vpop.permute.xlu0 %411
  %vm413 = vcmask 130048
  %s414 = scalar_lea.vmem %s1, 261
  %415 = vst.msk [vmem:[%s414] ss:$8 sm:$0x3] %vm413, %v412
  %s416 = scalar_lea.vmem %s1, 197
  %417 = vst.msk [vmem:[%s416] ss:$8 sm:$0xc] %vm413, %v412
  %s418 = scalar_lea.vmem %s1, 325
  %419 = vst.msk [vmem:[%s418] ss:$8 sm:$0x30] %vm413, %v412
  %s420 = scalar_lea.vmem %s1, 261
  %421 = vst.msk [vmem:[%s420] ss:$8 sm:$0xc0] %vm413, %v412
  %s422 = scalar_lea.vmem %s0, 32
  %v423 = vld.sshfl [vmem:[%s422] sm:$0xff pattern:$0xb3a29180]
  %424 = vrot.lane.b32.xlu0 %v423, 48
  %v425 = vpop.permute.xlu0 %424
  %vm426 = vcmask 130048
  %s427 = scalar_lea.vmem %s1, 37
  %428 = vst.msk [vmem:[%s427] ss:$8 sm:$0x3] %vm426, %v425
  %s429 = scalar_lea.vmem %s1, 69
  %430 = vst.msk [vmem:[%s429] ss:$8 sm:$0xc] %vm426, %v425
  %s431 = scalar_lea.vmem %s1, 101
  %432 = vst.msk [vmem:[%s431] ss:$8 sm:$0x30] %vm426, %v425
  %s433 = scalar_lea.vmem %s1, 133
  %434 = vst.msk [vmem:[%s433] ss:$8 sm:$0xc0] %vm426, %v425
  %s435 = scalar_lea.vmem %s0, 36
  %v436 = vld.sshfl [vmem:[%s435] sm:$0xff pattern:$0xb3a29180]
  %437 = vrot.lane.b32.xlu0 %v436, 48
  %v438 = vpop.permute.xlu0 %437
  %vm439 = vcmask 130048
  %s440 = scalar_lea.vmem %s1, 229
  %441 = vst.msk [vmem:[%s440] ss:$8 sm:$0x3] %vm439, %v438
  %s442 = scalar_lea.vmem %s1, 261
  %443 = vst.msk [vmem:[%s442] ss:$8 sm:$0xc] %vm439, %v438
  %s444 = scalar_lea.vmem %s1, 293
  %445 = vst.msk [vmem:[%s444] ss:$8 sm:$0x30] %vm439, %v438
  %s446 = scalar_lea.vmem %s1, 325
  %447 = vst.msk [vmem:[%s446] ss:$8 sm:$0xc0] %vm439, %v438
  %v448 = vld.sshfl [vmem:[%s0] sm:$0xff pattern:$0xb3a29180]
  %449 = vrot.lane.b32.xlu0 %v448, 32
  %v450 = vpop.permute.xlu0 %449
  %vm451 = vcmask 130048
  %s452 = scalar_lea.vmem %s1, 6
  %453 = vst.msk [vmem:[%s452] ss:$8 sm:$0x3] %vm451, %v450
  %s454 = scalar_lea.vmem %s1, 38
  %455 = vst.msk [vmem:[%s454] ss:$8 sm:$0xc] %vm451, %v450
  %s456 = scalar_lea.vmem %s1, 70
  %457 = vst.msk [vmem:[%s456] ss:$8 sm:$0x30] %vm451, %v450
  %s458 = scalar_lea.vmem %s1, 102
  %459 = vst.msk [vmem:[%s458] ss:$8 sm:$0xc0] %vm451, %v450
  %s460 = scalar_lea.vmem %s0, 4
  %v461 = vld.sshfl [vmem:[%s460] sm:$0xff pattern:$0xb3a29180]
  %462 = vrot.lane.b32.xlu0 %v461, 32
  %v463 = vpop.permute.xlu0 %462
  %vm464 = vcmask 130048
  %s465 = scalar_lea.vmem %s1, 198
  %466 = vst.msk [vmem:[%s465] ss:$8 sm:$0x3] %vm464, %v463
  %s467 = scalar_lea.vmem %s1, 230
  %468 = vst.msk [vmem:[%s467] ss:$8 sm:$0xc] %vm464, %v463
  %s469 = scalar_lea.vmem %s1, 262
  %470 = vst.msk [vmem:[%s469] ss:$8 sm:$0x30] %vm464, %v463
  %s471 = scalar_lea.vmem %s1, 294
  %472 = vst.msk [vmem:[%s471] ss:$8 sm:$0xc0] %vm464, %v463
  %s473 = scalar_lea.vmem %s0, 16
  %v474 = vld.sshfl [vmem:[%s473] sm:$0xff pattern:$0xa2b38091]
  %475 = vrot.lane.b32.xlu0 %v474, 32
  %v476 = vpop.permute.xlu0 %475
  %vm477 = vcmask 130048
  %s478 = scalar_lea.vmem %s1, 70
  %479 = vst.msk [vmem:[%s478] ss:$8 sm:$0x3] %vm477, %v476
  %s480 = scalar_lea.vmem %s1, 6
  %481 = vst.msk [vmem:[%s480] ss:$8 sm:$0xc] %vm477, %v476
  %s482 = scalar_lea.vmem %s1, 134
  %483 = vst.msk [vmem:[%s482] ss:$8 sm:$0x30] %vm477, %v476
  %s484 = scalar_lea.vmem %s1, 70
  %485 = vst.msk [vmem:[%s484] ss:$8 sm:$0xc0] %vm477, %v476
  %s486 = scalar_lea.vmem %s0, 20
  %v487 = vld.sshfl [vmem:[%s486] sm:$0xff pattern:$0xa2b38091]
  %488 = vrot.lane.b32.xlu0 %v487, 32
  %v489 = vpop.permute.xlu0 %488
  %vm490 = vcmask 130048
  %s491 = scalar_lea.vmem %s1, 262
  %492 = vst.msk [vmem:[%s491] ss:$8 sm:$0x3] %vm490, %v489
  %s493 = scalar_lea.vmem %s1, 198
  %494 = vst.msk [vmem:[%s493] ss:$8 sm:$0xc] %vm490, %v489
  %s495 = scalar_lea.vmem %s1, 326
  %496 = vst.msk [vmem:[%s495] ss:$8 sm:$0x30] %vm490, %v489
  %s497 = scalar_lea.vmem %s1, 262
  %498 = vst.msk [vmem:[%s497] ss:$8 sm:$0xc0] %vm490, %v489
  %s499 = scalar_lea.vmem %s0, 32
  %v500 = vld.sshfl [vmem:[%s499] sm:$0xff pattern:$0xb3a29180]
  %501 = vrot.lane.b32.xlu0 %v500, 32
  %v502 = vpop.permute.xlu0 %501
  %vm503 = vcmask 130048
  %s504 = scalar_lea.vmem %s1, 38
  %505 = vst.msk [vmem:[%s504] ss:$8 sm:$0x3] %vm503, %v502
  %s506 = scalar_lea.vmem %s1, 70
  %507 = vst.msk [vmem:[%s506] ss:$8 sm:$0xc] %vm503, %v502
  %s508 = scalar_lea.vmem %s1, 102
  %509 = vst.msk [vmem:[%s508] ss:$8 sm:$0x30] %vm503, %v502
  %s510 = scalar_lea.vmem %s1, 134
  %511 = vst.msk [vmem:[%s510] ss:$8 sm:$0xc0] %vm503, %v502
  %s512 = scalar_lea.vmem %s0, 36
  %v513 = vld.sshfl [vmem:[%s512] sm:$0xff pattern:$0xb3a29180]
  %514 = vrot.lane.b32.xlu0 %v513, 32
  %v515 = vpop.permute.xlu0 %514
  %vm516 = vcmask 130048
  %s517 = scalar_lea.vmem %s1, 230
  %518 = vst.msk [vmem:[%s517] ss:$8 sm:$0x3] %vm516, %v515
  %s519 = scalar_lea.vmem %s1, 262
  %520 = vst.msk [vmem:[%s519] ss:$8 sm:$0xc] %vm516, %v515
  %s521 = scalar_lea.vmem %s1, 294
  %522 = vst.msk [vmem:[%s521] ss:$8 sm:$0x30] %vm516, %v515
  %s523 = scalar_lea.vmem %s1, 326
  %524 = vst.msk [vmem:[%s523] ss:$8 sm:$0xc0] %vm516, %v515
  %v525 = vld.sshfl [vmem:[%s0] sm:$0xff pattern:$0xb3a29180]
  %526 = vrot.lane.b32.xlu0 %v525, 16
  %v527 = vpop.permute.xlu0 %526
  %vm528 = vcmask 130048
  %s529 = scalar_lea.vmem %s1, 7
  %530 = vst.msk [vmem:[%s529] ss:$8 sm:$0x3] %vm528, %v527
  %s531 = scalar_lea.vmem %s1, 39
  %532 = vst.msk [vmem:[%s531] ss:$8 sm:$0xc] %vm528, %v527
  %s533 = scalar_lea.vmem %s1, 71
  %534 = vst.msk [vmem:[%s533] ss:$8 sm:$0x30] %vm528, %v527
  %s535 = scalar_lea.vmem %s1, 103
  %536 = vst.msk [vmem:[%s535] ss:$8 sm:$0xc0] %vm528, %v527
  %s537 = scalar_lea.vmem %s0, 4
  %v538 = vld.sshfl [vmem:[%s537] sm:$0xff pattern:$0xb3a29180]
  %539 = vrot.lane.b32.xlu0 %v538, 16
  %v540 = vpop.permute.xlu0 %539
  %vm541 = vcmask 130048
  %s542 = scalar_lea.vmem %s1, 199
  %543 = vst.msk [vmem:[%s542] ss:$8 sm:$0x3] %vm541, %v540
  %s544 = scalar_lea.vmem %s1, 231
  %545 = vst.msk [vmem:[%s544] ss:$8 sm:$0xc] %vm541, %v540
  %s546 = scalar_lea.vmem %s1, 263
  %547 = vst.msk [vmem:[%s546] ss:$8 sm:$0x30] %vm541, %v540
  %s548 = scalar_lea.vmem %s1, 295
  %549 = vst.msk [vmem:[%s548] ss:$8 sm:$0xc0] %vm541, %v540
  %s550 = scalar_lea.vmem %s0, 16
  %v551 = vld.sshfl [vmem:[%s550] sm:$0xff pattern:$0xa2b38091]
  %552 = vrot.lane.b32.xlu0 %v551, 16
  %v553 = vpop.permute.xlu0 %552
  %vm554 = vcmask 130048
  %s555 = scalar_lea.vmem %s1, 71
  %556 = vst.msk [vmem:[%s555] ss:$8 sm:$0x3] %vm554, %v553
  %s557 = scalar_lea.vmem %s1, 7
  %558 = vst.msk [vmem:[%s557] ss:$8 sm:$0xc] %vm554, %v553
  %s559 = scalar_lea.vmem %s1, 135
  %560 = vst.msk [vmem:[%s559] ss:$8 sm:$0x30] %vm554, %v553
  %s561 = scalar_lea.vmem %s1, 71
  %562 = vst.msk [vmem:[%s561] ss:$8 sm:$0xc0] %vm554, %v553
  %s563 = scalar_lea.vmem %s0, 20
  %v564 = vld.sshfl [vmem:[%s563] sm:$0xff pattern:$0xa2b38091]
  %565 = vrot.lane.b32.xlu0 %v564, 16
  %v566 = vpop.permute.xlu0 %565
  %vm567 = vcmask 130048
  %s568 = scalar_lea.vmem %s1, 263
  %569 = vst.msk [vmem:[%s568] ss:$8 sm:$0x3] %vm567, %v566
  %s570 = scalar_lea.vmem %s1, 199
  %571 = vst.msk [vmem:[%s570] ss:$8 sm:$0xc] %vm567, %v566
  %s572 = scalar_lea.vmem %s1, 327
  %573 = vst.msk [vmem:[%s572] ss:$8 sm:$0x30] %vm567, %v566
  %s574 = scalar_lea.vmem %s1, 263
  %575 = vst.msk [vmem:[%s574] ss:$8 sm:$0xc0] %vm567, %v566
  %s576 = scalar_lea.vmem %s0, 32
  %v577 = vld.sshfl [vmem:[%s576] sm:$0xff pattern:$0xb3a29180]
  %578 = vrot.lane.b32.xlu0 %v577, 16
  %v579 = vpop.permute.xlu0 %578
  %vm580 = vcmask 130048
  %s581 = scalar_lea.vmem %s1, 39
  %582 = vst.msk [vmem:[%s581] ss:$8 sm:$0x3] %vm580, %v579
  %s583 = scalar_lea.vmem %s1, 71
  %584 = vst.msk [vmem:[%s583] ss:$8 sm:$0xc] %vm580, %v579
  %s585 = scalar_lea.vmem %s1, 103
  %586 = vst.msk [vmem:[%s585] ss:$8 sm:$0x30] %vm580, %v579
  %s587 = scalar_lea.vmem %s1, 135
  %588 = vst.msk [vmem:[%s587] ss:$8 sm:$0xc0] %vm580, %v579
  %s589 = scalar_lea.vmem %s0, 36
  %v590 = vld.sshfl [vmem:[%s589] sm:$0xff pattern:$0xb3a29180]
  %591 = vrot.lane.b32.xlu0 %v590, 16
  %v592 = vpop.permute.xlu0 %591
  %vm593 = vcmask 130048
  %s594 = scalar_lea.vmem %s1, 231
  %595 = vst.msk [vmem:[%s594] ss:$8 sm:$0x3] %vm593, %v592
  %s596 = scalar_lea.vmem %s1, 263
  %597 = vst.msk [vmem:[%s596] ss:$8 sm:$0xc] %vm593, %v592
  %s598 = scalar_lea.vmem %s1, 295
  %599 = vst.msk [vmem:[%s598] ss:$8 sm:$0x30] %vm593, %v592
  %s600 = scalar_lea.vmem %s1, 327
  %601 = vst.msk [vmem:[%s600] ss:$8 sm:$0xc0] %vm593, %v592

// kernel: custom-call
$region0: #{custom-call}
  %s0 = inlined_call_operand.vmem [shape: f32[3,16,16,8], index: 0, kind: input, shape index: {}]
  %s1 = inlined_call_operand.vmem [shape: f32[3,16,16,8], index: 1, kind: input, shape index: {}]
  %s2 = inlined_call_operand.hbm [shape: c64[3,16,16,8], index: 2, kind: output, shape index: {}]
  %s3 = scalar_lea.hbm %s2, 384
  $region1: #{custom-call} parent=0
    #allocation0 [shape = 's32[1]{0}', space=sflag, size = 0x4, scoped, tag = 'scoped memory for custom-call']
    %4 = vsyncpa [#allocation0], 0
    %s6 = sshll.u32 %s0, 4
    %s7 = int_to_ptr.vmem [resolvable:$true] %s6
    %s8 = sshll.u32 %s2, 4
    %s9 = int_to_ptr.hbm [resolvable:$true] %s8
    %11 = dma.vmem_to_hbm [thread:$0]  %s7, 6144, %s9, [#allocation0]
    %13 = dma.done [#allocation0], 6144
    %14 = vsyncpa [#allocation0], 1
  $region2: #{custom-call} parent=0
    #allocation1 [shape = 's32[1]{0}', space=sflag, size = 0x4, scoped, tag = 'scoped memory for custom-call']
    %15 = vsyncpa [#allocation1], 0
    %s17 = sshll.u32 %s1, 4
    %s18 = int_to_ptr.vmem [resolvable:$true] %s17
    %s19 = sshll.u32 %s3, 4
    %s20 = int_to_ptr.hbm [resolvable:$true] %s19
    %22 = dma.vmem_to_hbm [thread:$0]  %s18, 6144, %s20, [#allocation1]
    %24 = dma.done [#allocation1], 6144
    %25 = vsyncpa [#allocation1], 1

// kernel: psf_forward.1
$region0: #{psf_forward.1}
  #allocation0 [shape = 'u32[]', space=smem, size = 0x4, offset = 0x4, fixed_abs, tag = 'smem constant byte address 0x4 - core index']
  #allocation1 [shape = 'u32[72,128]{1,0:T(1,128)}', space=vmem, size = 0x9000, scoped, tag = 'internal scratch']
  %s0 = inlined_call_operand.vmem [shape: bf16[16,400], index: 0, kind: input, shape index: {}]
  %s1 = inlined_call_operand.hbm [shape: bf16[400,768], index: 1, kind: input, shape index: {}]
  %s2 = inlined_call_operand.vmem [shape: f32[16,768], index: 2, kind: output, shape index: {}]
  %s3 = sld [smem:[#allocation0]]
  $region64: #{psf_forward.1} parent=0
    _
  %s5 = ssub.s32 1, %s3
  %s6 = scalar_select 0, %s5, %s3
  $region1: #{psf_forward.1} parent=0
    #allocation2 [shape = 'u8[614400]{0}', space=vmem, size = 0x96000, scoped, tag = 'input window, operand 1']
    #allocation3 [shape = 's32[2]{0}', space=sflag, size = 0x8, scoped, tag = 'scoped memory for psf_forward.1']
    #allocation4 [shape = 'u8[49152]{0}', space=vmem, size = 0xc000, scoped, tag = 'output window, operand 0']
    %7 = vsyncpa [#allocation3], 0
    %s8 = scalar_lea.sflag [#allocation3], 1
    %9 = vsyncpa %s8, 0
    loop: start=0, step=1, limit=4
    $region2: #{psf_forward.1} parent=1 // loop_pre_header
      _
    $region3: #{psf_forward.1} parent=1 // loop_header
      %s11 = sphi 0, %s15
      %p12 = scmp.ge.s32.totalorder %s11, 4
      %s19 = sphi 0, %s19
      %s21 = sphi 0, %s19
      %s22 = sphi 0, %s21
      %s36 = sphi 0, %s22
      %s42 = sphi 0, %s44
      %s45 = sphi 0, %s42
      %s46 = sphi 0, %s45
      %s62 = sphi 0, %s46
      %s68 = sphi 0, %s70
      %s71 = sphi 0, %s68
      %s72 = sphi 0, %s71
      %s88 = sphi 0, %s72
    $region4: #{psf_forward.1} parent=1 // loop_header_branch
      %14 = sbr.rel (%p12) target = $region8
    $region5: #{psf_forward.1} parent=1 // loop_body
      %s16 = ssub.s32 %s11, 1
      %s17 = ssub.s32 %s11, 2
      %s18 = sadd.s32 %s11, 1
      %s20 = sadd.s32 %s19, 1
      %p23 = scmp.eq.s32.totalorder %s11, 1
      %p24 = scmp.ne.s32.totalorder %s19, %s21
      %p25 = scmp.eq.s32.totalorder %s11, 0
      %p26 = por %p24, %p25
      %p27 = scmp.ne.s32.totalorder %s19, %s21
      %p28 = scmp.eq.s32.totalorder %s16, 1
      %p29 = por %p27, %p28
      %p30 = scmp.ne.s32.totalorder %s21, %s22
      %p31 = scmp.eq.s32.totalorder %s16, 0
      %p32 = por %p30, %p31
      %p33 = scmp.ne.s32.totalorder %s21, %s22
      %p34 = scmp.eq.s32.totalorder %s17, 1
      %p35 = por %p33, %p34
      %p37 = scmp.ne.s32.totalorder %s22, %s36
      %p38 = scmp.eq.s32.totalorder %s17, 0
      %p39 = por %p37, %p38
      %s40 = ssub.s32 %s11, %s18
      %p41 = scmp.eq.s32.totalorder %s40, 0
      %s43 = sadd.s32 %s42, 1
      %s44 = scalar_select %p41, %s42, %s43
      %p47 = pneg %p41
      %p48 = scmp.eq.s32.totalorder %s11, 1
      %p49 = por %p47, %p48
      %p50 = scmp.ne.s32.totalorder %s42, %s45
      %p51 = scmp.eq.s32.totalorder %s11, 0
      %p52 = por %p50, %p51
      %p53 = scmp.ne.s32.totalorder %s42, %s45
      %p54 = scmp.eq.s32.totalorder %s16, 1
      %p55 = por %p53, %p54
      %p56 = scmp.ne.s32.totalorder %s45, %s46
      %p57 = scmp.eq.s32.totalorder %s16, 0
      %p58 = por %p56, %p57
      %p59 = scmp.ne.s32.totalorder %s45, %s46
      %p60 = scmp.eq.s32.totalorder %s17, 1
      %p61 = por %p59, %p60
      %p63 = scmp.ne.s32.totalorder %s46, %s62
      %p64 = scmp.eq.s32.totalorder %s17, 0
      %p65 = por %p63, %p64
      %s66 = ssub.s32 %s11, %s18
      %p67 = scmp.eq.s32.totalorder %s66, 0
      %s69 = sadd.s32 %s68, 1
      %s70 = scalar_select %p67, %s68, %s69
      %p73 = pneg %p67
      %p74 = scmp.eq.s32.totalorder %s11, 1
      %p75 = por %p73, %p74
      %p76 = scmp.ne.s32.totalorder %s68, %s71
      %p77 = scmp.eq.s32.totalorder %s11, 0
      %p78 = por %p76, %p77
      %p79 = scmp.ne.s32.totalorder %s68, %s71
      %p80 = scmp.eq.s32.totalorder %s16, 1
      %p81 = por %p79, %p80
      %p82 = scmp.ne.s32.totalorder %s71, %s72
      %p83 = scmp.eq.s32.totalorder %s16, 0
      %p84 = por %p82, %p83
      %p85 = scmp.ne.s32.totalorder %s71, %s72
      %p86 = scmp.eq.s32.totalorder %s17, 1
      %p87 = por %p85, %p86
      %p89 = scmp.ne.s32.totalorder %s72, %s88
      %p90 = scmp.eq.s32.totalorder %s17, 0
      %p91 = por %p89, %p90
      %p92 = scmp.le.s32.totalorder 1, %s11
      %p93 = scmp.lt.s32.totalorder %s11, 3
      %p94 = pnand %p92, %p93
      %p95 = pneg %p94
      // Predicated region
      $region9: #{psf_forward.1} parent=5 // pred_check
        _
      $region10: #{psf_forward.1} parent=5 // pred_check_branch
        %97 = sbr.rel (%p94) target = $region12
      $region11: #{psf_forward.1} parent=5 // pred_region
        %s98 = ssub.s32 %s11, 1
        // Predicated region
        $region13: #{psf_forward.1} parent=11 // pred_check
          %p99 = pneg %p32
        $region14: #{psf_forward.1} parent=11 // pred_check_branch
          %101 = sbr.rel (%p99) target = $region16
        $region15: #{psf_forward.1} parent=11 // pred_region
          _
        $region16: #{psf_forward.1} parent=11 // pred_fallthru
          _
      $region12: #{psf_forward.1} parent=5 // pred_fallthru
        _
      %p102 = scmp.lt.s32.totalorder %s11, 2
      // Predicated region
      $region17: #{psf_forward.1} parent=5 // pred_check
        %p103 = pneg %p102
      $region18: #{psf_forward.1} parent=5 // pred_check_branch
        %105 = sbr.rel (%p103) target = $region20
      $region19: #{psf_forward.1} parent=5 // pred_region
        // Predicated region
        $region21: #{psf_forward.1} parent=19 // pred_check
          %p106 = pneg %p52
        $region22: #{psf_forward.1} parent=19 // pred_check_branch
          %108 = sbr.rel (%p106) target = $region24
        $region23: #{psf_forward.1} parent=19 // pred_region
          %s109 = sand.u32 %s42, 1
          %s110 = scalar_lea.sflag [#allocation3], %s109
          %s111 = sand.u32 %s42, 1
          %s112 = smul.addr %s111, 600
          %s113 = scalar_lea.vmem [#allocation2], %s112
          %s114 = smul.u32 3, %s11
          %116 = vsyncadd %s110, 0
          %s117 = smul.addr %s114, 4
          %s118 = scalar_lea.hbm %s1, %s117
          %s119 = sshll.u32 %s118, 4
          %s120 = int_to_ptr.hbm [resolvable:$true] %s119
          %s121 = sshll.u32 %s113, 4
          %s122 = int_to_ptr.vmem [resolvable:$true] %s121
          %127 = dma.hbm_to_vmem [thread:$0]  %s120, 9600, %s122, %s110, 384, 192, 12
        $region24: #{psf_forward.1} parent=19 // pred_fallthru
          _
      $region20: #{psf_forward.1} parent=5 // pred_fallthru
        _
      %p128 = scmp.le.s32.totalorder 1, %s11
      %p129 = scmp.lt.s32.totalorder %s11, 3
      %p130 = pnand %p128, %p129
      %p131 = pneg %p130
      // Predicated region
      $region25: #{psf_forward.1} parent=5 // pred_check
        _
      $region26: #{psf_forward.1} parent=5 // pred_check_branch
        %133 = sbr.rel (%p130) target = $region28
      $region27: #{psf_forward.1} parent=5 // pred_region
        %s134 = ssub.s32 %s11, 1
        %s135 = sand.u32 %s45, 1
        %s136 = scalar_lea.sflag [#allocation3], %s135
        %s137 = sand.u32 %s45, 1
        %s138 = smul.addr %s137, 600
        %s139 = scalar_lea.vmem [#allocation2], %s138
        // Predicated region
        $region29: #{psf_forward.1} parent=27 // pred_check
          %p140 = pneg %p58
        $region30: #{psf_forward.1} parent=27 // pred_check_branch
          %142 = sbr.rel (%p140) target = $region32
        $region31: #{psf_forward.1} parent=27 // pred_region
          %144 = dma.done %s136, 9600
        $region32: #{psf_forward.1} parent=27 // pred_fallthru
          _
        %p145 = pneg %p32
        %p146 = pneg %p29
        %s147 = sand.u32 %s45, 1
        %s148 = scalar_lea.sflag [#allocation3], %s147
        %s149 = sand.u32 %s45, 1
        %s150 = smul.addr %s149, 600
        %s151 = scalar_lea.vmem [#allocation2], %s150
        %p152 = pneg %p58
        %p153 = pneg %p55
        %p154 = pneg %p84
        %p155 = pneg %p81
        %s156 = sand.u32 %s71, 1
        %s157 = sand.u32 %s71, 1
        %s158 = smul.addr %s157, 48
        %s159 = scalar_lea.vmem [#allocation4], %s158
        %s160 = smul.u32 3, %s16
        %s161 = smul.u32 3, %s16
        %v163 = vld [vmem:[%s0] sm:$0xff]
        %v164 = vld [vmem:[%s0 + $0x8] sm:$0xff]
        %v165 = vld [vmem:[%s0 + $0x10] sm:$0xff]
        %v166 = vld [vmem:[%s0 + $0x18] sm:$0xff]
        %v167 = vld [vmem:[%s139] sm:$0xff]
        %v168 = vld [vmem:[%s139 + $0x8] sm:$0xf]
        %v169 = vld [vmem:[%s139 + $0xc] sm:$0xff]
        %v170 = vld [vmem:[%s139 + $0x14] sm:$0xf]
        %v171 = vld [vmem:[%s139 + $0x18] sm:$0xff]
        %v172 = vld [vmem:[%s139 + $0x20] sm:$0xf]
        %v173 = vld [vmem:[%s139 + $0x24] sm:$0xff]
        %v174 = vld [vmem:[%s139 + $0x2c] sm:$0xf]
        %v175 = vld [vmem:[%s139 + $0x30] sm:$0xff]
        %v176 = vld [vmem:[%s139 + $0x38] sm:$0xf]
        %v177 = vld [vmem:[%s139 + $0x3c] sm:$0xff]
        %v178 = vld [vmem:[%s139 + $0x44] sm:$0xf]
        %v179 = vld [vmem:[%s139 + $0x48] sm:$0xff]
        %v180 = vld [vmem:[%s139 + $0x50] sm:$0xf]
        %v181 = vld [vmem:[%s139 + $0x54] sm:$0xff]
        %v182 = vld [vmem:[%s139 + $0x5c] sm:$0xf]
        %v183 = vld [vmem:[%s139 + $0x60] sm:$0xff]
        %v184 = vld [vmem:[%s139 + $0x68] sm:$0xf]
        %v185 = vld [vmem:[%s139 + $0x6c] sm:$0xff]
        %v186 = vld [vmem:[%s139 + $0x74] sm:$0xf]
        %v187 = vld [vmem:[%s139 + $0x78] sm:$0xff]
        %v188 = vld [vmem:[%s139 + $0x80] sm:$0xf]
        %v189 = vld [vmem:[%s139 + $0x84] sm:$0xff]
        %v190 = vld [vmem:[%s139 + $0x8c] sm:$0xf]
        %v191 = vld [vmem:[%s139 + $0x90] sm:$0xff]
        %v192 = vld [vmem:[%s139 + $0x98] sm:$0xf]
        %v193 = vld [vmem:[%s139 + $0x9c] sm:$0xff]
        %v194 = vld [vmem:[%s139 + $0xa4] sm:$0xf]
        %v195 = vld [vmem:[%s139 + $0xa8] sm:$0xff]
        %v196 = vld [vmem:[%s139 + $0xb0] sm:$0xf]
        %v197 = vld [vmem:[%s139 + $0xb4] sm:$0xff]
        %v198 = vld [vmem:[%s139 + $0xbc] sm:$0xf]
        %v199 = vld [vmem:[%s139 + $0xc0] sm:$0xff]
        %v200 = vld [vmem:[%s139 + $0xc8] sm:$0xf]
        %v201 = vld [vmem:[%s139 + $0xcc] sm:$0xff]
        %v202 = vld [vmem:[%s139 + $0xd4] sm:$0xf]
        %v203 = vld [vmem:[%s139 + $0xd8] sm:$0xff]
        %v204 = vld [vmem:[%s139 + $0xe0] sm:$0xf]
        %v205 = vld [vmem:[%s139 + $0xe4] sm:$0xff]
        %v206 = vld [vmem:[%s139 + $0xec] sm:$0xf]
        %v207 = vld [vmem:[%s139 + $0xf0] sm:$0xff]
        %v208 = vld [vmem:[%s139 + $0xf8] sm:$0xf]
        %v209 = vld [vmem:[%s139 + $0xfc] sm:$0xff]
        %v210 = vld [vmem:[%s139 + $0x104] sm:$0xf]
        %v211 = vld [vmem:[%s139 + $0x108] sm:$0xff]
        %v212 = vld [vmem:[%s139 + $0x110] sm:$0xf]
        %v213 = vld [vmem:[%s139 + $0x114] sm:$0xff]
        %v214 = vld [vmem:[%s139 + $0x11c] sm:$0xf]
        %v215 = vld [vmem:[%s139 + $0x120] sm:$0xff]
        %v216 = vld [vmem:[%s139 + $0x128] sm:$0xf]
        %v217 = vld [vmem:[%s139 + $0x12c] sm:$0xff]
        %v218 = vld [vmem:[%s139 + $0x134] sm:$0xf]
        %v219 = vld [vmem:[%s139 + $0x138] sm:$0xff]
        %v220 = vld [vmem:[%s139 + $0x140] sm:$0xf]
        %v221 = vld [vmem:[%s139 + $0x144] sm:$0xff]
        %v222 = vld [vmem:[%s139 + $0x14c] sm:$0xf]
        %v223 = vld [vmem:[%s139 + $0x150] sm:$0xff]
        %v224 = vld [vmem:[%s139 + $0x158] sm:$0xf]
        %v225 = vld [vmem:[%s139 + $0x15c] sm:$0xff]
        %v226 = vld [vmem:[%s139 + $0x164] sm:$0xf]
        %v227 = vld [vmem:[%s139 + $0x168] sm:$0xff]
        %v228 = vld [vmem:[%s139 + $0x170] sm:$0xf]
        %v229 = vld [vmem:[%s139 + $0x174] sm:$0xff]
        %v230 = vld [vmem:[%s139 + $0x17c] sm:$0xf]
        %v231 = vld [vmem:[%s139 + $0x180] sm:$0xff]
        %v232 = vld [vmem:[%s139 + $0x188] sm:$0xf]
        %v233 = vld [vmem:[%s139 + $0x18c] sm:$0xff]
        %v234 = vld [vmem:[%s139 + $0x194] sm:$0xf]
        %v235 = vld [vmem:[%s139 + $0x198] sm:$0xff]
        %v236 = vld [vmem:[%s139 + $0x1a0] sm:$0xf]
        %v237 = vld [vmem:[%s139 + $0x1a4] sm:$0xff]
        %v238 = vld [vmem:[%s139 + $0x1ac] sm:$0xf]
        %v239 = vld [vmem:[%s139 + $0x1b0] sm:$0xff]
        %v240 = vld [vmem:[%s139 + $0x1b8] sm:$0xf]
        %v241 = vld [vmem:[%s139 + $0x1bc] sm:$0xff]
        %v242 = vld [vmem:[%s139 + $0x1c4] sm:$0xf]
        %v243 = vld [vmem:[%s139 + $0x1c8] sm:$0xff]
        %v244 = vld [vmem:[%s139 + $0x1d0] sm:$0xf]
        %v245 = vld [vmem:[%s139 + $0x1d4] sm:$0xff]
        %v246 = vld [vmem:[%s139 + $0x1dc] sm:$0xf]
        %v247 = vld [vmem:[%s139 + $0x1e0] sm:$0xff]
        %v248 = vld [vmem:[%s139 + $0x1e8] sm:$0xf]
        %v249 = vld [vmem:[%s139 + $0x1ec] sm:$0xff]
        %v250 = vld [vmem:[%s139 + $0x1f4] sm:$0xf]
        %v251 = vld [vmem:[%s139 + $0x1f8] sm:$0xff]
        %v252 = vld [vmem:[%s139 + $0x200] sm:$0xf]
        %v253 = vld [vmem:[%s139 + $0x204] sm:$0xff]
        %v254 = vld [vmem:[%s139 + $0x20c] sm:$0xf]
        %v255 = vld [vmem:[%s139 + $0x210] sm:$0xff]
        %v256 = vld [vmem:[%s139 + $0x218] sm:$0xf]
        %v257 = vld [vmem:[%s139 + $0x21c] sm:$0xff]
        %v258 = vld [vmem:[%s139 + $0x224] sm:$0xf]
        %v259 = vld [vmem:[%s139 + $0x228] sm:$0xff]
        %v260 = vld [vmem:[%s139 + $0x230] sm:$0xf]
        %v261 = vld [vmem:[%s139 + $0x234] sm:$0xff]
        %v262 = vld [vmem:[%s139 + $0x23c] sm:$0xf]
        %v263 = vld [vmem:[%s139 + $0x240] sm:$0xff]
        %v264 = vld [vmem:[%s139 + $0x248] sm:$0xf]
        %v265 = vld [vmem:[%s139 + $0x24c] sm:$0xff]
        %v266 = vld [vmem:[%s139 + $0x254] sm:$0xf]
        %v271 = vunpack.c.l.b16 %v163
        %v272 = vunpack.c.h.b16 %v163
        %v273 = vunpack.c.l.b16 %v164
        %v274 = vunpack.c.h.b16 %v164
        %v275 = vunpack.c.l.b16 %v165
        %v276 = vunpack.c.h.b16 %v165
        %v277 = vunpack.c.l.b16 %v166
        %v278 = vunpack.c.h.b16 %v166
        %v279 = vpack.c.b16 %v275, %v271
        %v280 = vpack.c.b16 %v276, %v272
        %v281 = vpack.c.b16 %v277, %v273
        %v282 = vpack.c.b16 %v278, %v274
        %v386 = vunpack.c.l.b16 %v167
        %v387 = vunpack.c.h.b16 %v167
        %v388 = vunpack.c.l.b16 %v168
        %v389 = vunpack.c.l.b16 %v169
        %v390 = vunpack.c.h.b16 %v169
        %v391 = vunpack.c.l.b16 %v170
        %v392 = vunpack.c.l.b16 %v171
        %v393 = vunpack.c.h.b16 %v171
        %v394 = vunpack.c.l.b16 %v172
        %v395 = vunpack.c.l.b16 %v173
        %v396 = vunpack.c.h.b16 %v173
        %v397 = vunpack.c.l.b16 %v174
        %v398 = vunpack.c.l.b16 %v175
        %v399 = vunpack.c.h.b16 %v175
        %v400 = vunpack.c.l.b16 %v176
        %v401 = vunpack.c.l.b16 %v177
        %v402 = vunpack.c.h.b16 %v177
        %v403 = vunpack.c.l.b16 %v178
        %v404 = vunpack.c.l.b16 %v179
        %v405 = vunpack.c.h.b16 %v179
        %v406 = vunpack.c.l.b16 %v180
        %v407 = vunpack.c.l.b16 %v181
        %v408 = vunpack.c.h.b16 %v181
        %v409 = vunpack.c.l.b16 %v182
        %v410 = vunpack.c.l.b16 %v183
        %v411 = vunpack.c.h.b16 %v183
        %v412 = vunpack.c.l.b16 %v184
        %v413 = vunpack.c.l.b16 %v185
        %v414 = vunpack.c.h.b16 %v185
        %v415 = vunpack.c.l.b16 %v186
        %v416 = vunpack.c.l.b16 %v187
        %v417 = vunpack.c.h.b16 %v187
        %v418 = vunpack.c.l.b16 %v188
        %v419 = vunpack.c.l.b16 %v189
        %v420 = vunpack.c.h.b16 %v189
        %v421 = vunpack.c.l.b16 %v190
        %v422 = vunpack.c.l.b16 %v191
        %v423 = vunpack.c.h.b16 %v191
        %v424 = vunpack.c.l.b16 %v192
        %v425 = vunpack.c.l.b16 %v193
        %v426 = vunpack.c.h.b16 %v193
        %v427 = vunpack.c.l.b16 %v194
        %v428 = vunpack.c.l.b16 %v195
        %v429 = vunpack.c.h.b16 %v195
        %v430 = vunpack.c.l.b16 %v196
        %v431 = vunpack.c.l.b16 %v197
        %v432 = vunpack.c.h.b16 %v197
        %v433 = vunpack.c.l.b16 %v198
        %v434 = vunpack.c.l.b16 %v199
        %v435 = vunpack.c.h.b16 %v199
        %v436 = vunpack.c.l.b16 %v200
        %v437 = vunpack.c.l.b16 %v201
        %v438 = vunpack.c.h.b16 %v201
        %v439 = vunpack.c.l.b16 %v202
        %v440 = vunpack.c.l.b16 %v203
        %v441 = vunpack.c.h.b16 %v203
        %v442 = vunpack.c.l.b16 %v204
        %v443 = vunpack.c.l.b16 %v205
        %v444 = vunpack.c.h.b16 %v205
        %v445 = vunpack.c.l.b16 %v206
        %v446 = vunpack.c.l.b16 %v207
        %v447 = vunpack.c.h.b16 %v207
        %v448 = vunpack.c.l.b16 %v208
        %v449 = vunpack.c.l.b16 %v209
        %v450 = vunpack.c.h.b16 %v209
        %v451 = vunpack.c.l.b16 %v210
        %v452 = vunpack.c.l.b16 %v211
        %v453 = vunpack.c.h.b16 %v211
        %v454 = vunpack.c.l.b16 %v212
        %v455 = vunpack.c.l.b16 %v213
        %v456 = vunpack.c.h.b16 %v213
        %v457 = vunpack.c.l.b16 %v214
        %v458 = vunpack.c.l.b16 %v215
        %v459 = vunpack.c.h.b16 %v215
        %v460 = vunpack.c.l.b16 %v216
        %v461 = vunpack.c.l.b16 %v217
        %v462 = vunpack.c.h.b16 %v217
        %v463 = vunpack.c.l.b16 %v218
        %v464 = vunpack.c.l.b16 %v219
        %v465 = vunpack.c.h.b16 %v219
        %v466 = vunpack.c.l.b16 %v220
        %v467 = vunpack.c.l.b16 %v221
        %v468 = vunpack.c.h.b16 %v221
        %v469 = vunpack.c.l.b16 %v222
        %v470 = vunpack.c.l.b16 %v223
        %v471 = vunpack.c.h.b16 %v223
        %v472 = vunpack.c.l.b16 %v224
        %v473 = vunpack.c.l.b16 %v225
        %v474 = vunpack.c.h.b16 %v225
        %v475 = vunpack.c.l.b16 %v226
        %v476 = vunpack.c.l.b16 %v227
        %v477 = vunpack.c.h.b16 %v227
        %v478 = vunpack.c.l.b16 %v228
        %v479 = vunpack.c.l.b16 %v229
        %v480 = vunpack.c.h.b16 %v229
        %v481 = vunpack.c.l.b16 %v230
        %v482 = vunpack.c.l.b16 %v231
        %v483 = vunpack.c.h.b16 %v231
        %v484 = vunpack.c.l.b16 %v232
        %v485 = vunpack.c.l.b16 %v233
        %v486 = vunpack.c.h.b16 %v233
        %v487 = vunpack.c.l.b16 %v234
        %v488 = vunpack.c.l.b16 %v235
        %v489 = vunpack.c.h.b16 %v235
        %v490 = vunpack.c.l.b16 %v236
        %v491 = vunpack.c.l.b16 %v237
        %v492 = vunpack.c.h.b16 %v237
        %v493 = vunpack.c.l.b16 %v238
        %v494 = vunpack.c.l.b16 %v239
        %v495 = vunpack.c.h.b16 %v239
        %v496 = vunpack.c.l.b16 %v240
        %v497 = vunpack.c.l.b16 %v241
        %v498 = vunpack.c.h.b16 %v241
        %v499 = vunpack.c.l.b16 %v242
        %v500 = vunpack.c.l.b16 %v243
        %v501 = vunpack.c.h.b16 %v243
        %v502 = vunpack.c.l.b16 %v244
        %v503 = vunpack.c.l.b16 %v245
        %v504 = vunpack.c.h.b16 %v245
        %v505 = vunpack.c.l.b16 %v246
        %v506 = vunpack.c.l.b16 %v247
        %v507 = vunpack.c.h.b16 %v247
        %v508 = vunpack.c.l.b16 %v248
        %v509 = vunpack.c.l.b16 %v249
        %v510 = vunpack.c.h.b16 %v249
        %v511 = vunpack.c.l.b16 %v250
        %v512 = vunpack.c.l.b16 %v251
        %v513 = vunpack.c.h.b16 %v251
        %v514 = vunpack.c.l.b16 %v252
        %v515 = vunpack.c.l.b16 %v253
        %v516 = vunpack.c.h.b16 %v253
        %v517 = vunpack.c.l.b16 %v254
        %v518 = vunpack.c.l.b16 %v255
        %v519 = vunpack.c.h.b16 %v255
        %v520 = vunpack.c.l.b16 %v256
        %v521 = vunpack.c.l.b16 %v257
        %v522 = vunpack.c.h.b16 %v257
        %v523 = vunpack.c.l.b16 %v258
        %v524 = vunpack.c.l.b16 %v259
        %v525 = vunpack.c.h.b16 %v259
        %v526 = vunpack.c.l.b16 %v260
        %v527 = vunpack.c.l.b16 %v261
        %v528 = vunpack.c.h.b16 %v261
        %v529 = vunpack.c.l.b16 %v262
        %v530 = vunpack.c.l.b16 %v263
        %v531 = vunpack.c.h.b16 %v263
        %v532 = vunpack.c.l.b16 %v264
        %v533 = vunpack.c.l.b16 %v265
        %v534 = vunpack.c.h.b16 %v265
        %v535 = vunpack.c.l.b16 %v266
        %v536 = vpack.c.b16 %v389, %v386
        %v537 = vpack.c.b16 %v390, %v387
        %v538 = vpack.c.b16 %v391, %v388
        %v539 = vpack.c.b16 %v395, %v392
        %v540 = vpack.c.b16 %v396, %v393
        %v541 = vpack.c.b16 %v397, %v394
        %v542 = vpack.c.b16 %v401, %v398
        %v543 = vpack.c.b16 %v402, %v399
        %v544 = vpack.c.b16 %v403, %v400
        %v545 = vpack.c.b16 %v407, %v404
        %v546 = vpack.c.b16 %v408, %v405
        %v547 = vpack.c.b16 %v409, %v406
        %v548 = vpack.c.b16 %v413, %v410
        %v549 = vpack.c.b16 %v414, %v411
        %v550 = vpack.c.b16 %v415, %v412
        %v551 = vpack.c.b16 %v419, %v416
        %v552 = vpack.c.b16 %v420, %v417
        %v553 = vpack.c.b16 %v421, %v418
        %v554 = vpack.c.b16 %v425, %v422
        %v555 = vpack.c.b16 %v426, %v423
        %v556 = vpack.c.b16 %v427, %v424
        %v557 = vpack.c.b16 %v431, %v428
        %v558 = vpack.c.b16 %v432, %v429
        %v559 = vpack.c.b16 %v433, %v430
        %v560 = vpack.c.b16 %v437, %v434
        %v561 = vpack.c.b16 %v438, %v435
        %v562 = vpack.c.b16 %v439, %v436
        %v563 = vpack.c.b16 %v443, %v440
        %v564 = vpack.c.b16 %v444, %v441
        %v565 = vpack.c.b16 %v445, %v442
        %v566 = vpack.c.b16 %v449, %v446
        %v567 = vpack.c.b16 %v450, %v447
        %v568 = vpack.c.b16 %v451, %v448
        %v569 = vpack.c.b16 %v455, %v452
        %v570 = vpack.c.b16 %v456, %v453
        %v571 = vpack.c.b16 %v457, %v454
        %v572 = vpack.c.b16 %v461, %v458
        %v573 = vpack.c.b16 %v462, %v459
        %v574 = vpack.c.b16 %v463, %v460
        %v575 = vpack.c.b16 %v467, %v464
        %v576 = vpack.c.b16 %v468, %v465
        %v577 = vpack.c.b16 %v469, %v466
        %v578 = vpack.c.b16 %v473, %v470
        %v579 = vpack.c.b16 %v474, %v471
        %v580 = vpack.c.b16 %v475, %v472
        %v581 = vpack.c.b16 %v479, %v476
        %v582 = vpack.c.b16 %v480, %v477
        %v583 = vpack.c.b16 %v481, %v478
        %v584 = vpack.c.b16 %v485, %v482
        %v585 = vpack.c.b16 %v486, %v483
        %v586 = vpack.c.b16 %v487, %v484
        %v587 = vpack.c.b16 %v491, %v488
        %v588 = vpack.c.b16 %v492, %v489
        %v589 = vpack.c.b16 %v493, %v490
        %v590 = vpack.c.b16 %v497, %v494
        %v591 = vpack.c.b16 %v498, %v495
        %v592 = vpack.c.b16 %v499, %v496
        %v593 = vpack.c.b16 %v503, %v500
        %v594 = vpack.c.b16 %v504, %v501
        %v595 = vpack.c.b16 %v505, %v502
        %v596 = vpack.c.b16 %v509, %v506
        %v597 = vpack.c.b16 %v510, %v507
        %v598 = vpack.c.b16 %v511, %v508
        %v599 = vpack.c.b16 %v515, %v512
        %v600 = vpack.c.b16 %v516, %v513
        %v601 = vpack.c.b16 %v517, %v514
        %v602 = vpack.c.b16 %v521, %v518
        %v603 = vpack.c.b16 %v522, %v519
        %v604 = vpack.c.b16 %v523, %v520
        %v605 = vpack.c.b16 %v527, %v524
        %v606 = vpack.c.b16 %v528, %v525
        %v607 = vpack.c.b16 %v529, %v526
        %v608 = vpack.c.b16 %v533, %v530
        %v609 = vpack.c.b16 %v534, %v531
        %v610 = vpack.c.b16 %v535, %v532
        %vm686 = vcmask 130048
        %v688 = vsel %vm686, %v282, 0
        %690 = vmatpush.bf16.msra.mxu0 %v557
        %691 = vmatpush.bf16.msra.mxu0 %v554
        %692 = vmatpush.bf16.msra.mxu0 %v551
        %693 = vmatpush.bf16.msra.mxu0 %v548
        %694 = vmatpush.bf16.msra.mxu0 %v545
        %695 = vmatpush.bf16.msra.mxu0 %v542
        %696 = vmatpush.bf16.msra.mxu0 %v539
        %697 = vmatpush.bf16.msra.mxu0 %v536
        %698 = vmatmul.bf16.gmra.mxu0 %v279
        %v699 = vpop.f32.mrf.mxu0
        %v700 = vadd.f32 0.0, %v699
        %v701 = vpop.f32.mrf.mxu0
        %v702 = vadd.f32 0.0, %v701
        %703 = vdwg.mxu0
        %704 = vmatpush.bf16.msra.mxu0 %v581
        %705 = vmatpush.bf16.msra.mxu0 %v578
        %706 = vmatpush.bf16.msra.mxu0 %v575
        %707 = vmatpush.bf16.msra.mxu0 %v572
        %708 = vmatpush.bf16.msra.mxu0 %v569
        %709 = vmatpush.bf16.msra.mxu0 %v566
        %710 = vmatpush.bf16.msra.mxu0 %v563
        %711 = vmatpush.bf16.msra.mxu0 %v560
        %712 = vmatmul.bf16.gmra.mxu0 %v280
        %v713 = vpop.f32.mrf.mxu0
        %v714 = vadd.f32 %v700, %v713
        %v715 = vpop.f32.mrf.mxu0
        %v716 = vadd.f32 %v702, %v715
        %717 = vdwg.mxu0
        %718 = vmatpush.bf16.msra.mxu0 %v605
        %719 = vmatpush.bf16.msra.mxu0 %v602
        %720 = vmatpush.bf16.msra.mxu0 %v599
        %721 = vmatpush.bf16.msra.mxu0 %v596
        %722 = vmatpush.bf16.msra.mxu0 %v593
        %723 = vmatpush.bf16.msra.mxu0 %v590
        %724 = vmatpush.bf16.msra.mxu0 %v587
        %725 = vmatpush.bf16.msra.mxu0 %v584
        %726 = vmatmul.bf16.gmra.mxu0 %v281
        %v727 = vpop.f32.mrf.mxu0
        %v728 = vadd.f32 %v714, %v727
        %v729 = vpop.f32.mrf.mxu0
        %v730 = vadd.f32 %v716, %v729
        %731 = vdwg.mxu0
        %732 = vmatpush.bf16.msra.mxu0 0
        %733 = vmatpush.bf16.msra.mxu0 0
        %734 = vmatpush.bf16.msra.mxu0 0
        %735 = vmatpush.bf16.msra.mxu0 0
        %736 = vmatpush.bf16.msra.mxu0 0
        %737 = vmatpush.bf16.msra.mxu0 0
        %738 = vmatpush.bf16.msra.mxu0 0
        %739 = vmatpush.bf16.msra.mxu0 %v608
        %740 = vmatmul.bf16.gmra.mxu0 %v688
        %v741 = vpop.f32.mrf.mxu0
        %v742 = vadd.f32 %v728, %v741
        %v743 = vpop.f32.mrf.mxu0
        %v744 = vadd.f32 %v730, %v743
        %745 = vdwg.mxu0
        %746 = vmatpush.bf16.msra.mxu0 %v558
        %747 = vmatpush.bf16.msra.mxu0 %v555
        %748 = vmatpush.bf16.msra.mxu0 %v552
        %749 = vmatpush.bf16.msra.mxu0 %v549
        %750 = vmatpush.bf16.msra.mxu0 %v546
        %751 = vmatpush.bf16.msra.mxu0 %v543
        %752 = vmatpush.bf16.msra.mxu0 %v540
        %753 = vmatpush.bf16.msra.mxu0 %v537
        %754 = vmatmul.bf16.gmra.mxu0 %v279
        %v755 = vpop.f32.mrf.mxu0
        %v756 = vadd.f32 0.0, %v755
        %v757 = vpop.f32.mrf.mxu0
        %v758 = vadd.f32 0.0, %v757
        %759 = vdwg.mxu0
        %760 = vmatpush.bf16.msra.mxu0 %v582
        %761 = vmatpush.bf16.msra.mxu0 %v579
        %762 = vmatpush.bf16.msra.mxu0 %v576
        %763 = vmatpush.bf16.msra.mxu0 %v573
        %764 = vmatpush.bf16.msra.mxu0 %v570
        %765 = vmatpush.bf16.msra.mxu0 %v567
        %766 = vmatpush.bf16.msra.mxu0 %v564
        %767 = vmatpush.bf16.msra.mxu0 %v561
        %768 = vmatmul.bf16.gmra.mxu0 %v280
        %v769 = vpop.f32.mrf.mxu0
        %v770 = vadd.f32 %v756, %v769
        %v771 = vpop.f32.mrf.mxu0
        %v772 = vadd.f32 %v758, %v771
        %773 = vdwg.mxu0
        %774 = vmatpush.bf16.msra.mxu0 %v606
        %775 = vmatpush.bf16.msra.mxu0 %v603
        %776 = vmatpush.bf16.msra.mxu0 %v600
        %777 = vmatpush.bf16.msra.mxu0 %v597
        %778 = vmatpush.bf16.msra.mxu0 %v594
        %779 = vmatpush.bf16.msra.mxu0 %v591
        %780 = vmatpush.bf16.msra.mxu0 %v588
        %781 = vmatpush.bf16.msra.mxu0 %v585
        %782 = vmatmul.bf16.gmra.mxu0 %v281
        %v783 = vpop.f32.mrf.mxu0
        %v784 = vadd.f32 %v770, %v783
        %v785 = vpop.f32.mrf.mxu0
        %v786 = vadd.f32 %v772, %v785
        %787 = vdwg.mxu0
        %788 = vmatpush.bf16.msra.mxu0 0
        %789 = vmatpush.bf16.msra.mxu0 0
        %790 = vmatpush.bf16.msra.mxu0 0
        %791 = vmatpush.bf16.msra.mxu0 0
        %792 = vmatpush.bf16.msra.mxu0 0
        %793 = vmatpush.bf16.msra.mxu0 0
        %794 = vmatpush.bf16.msra.mxu0 0
        %795 = vmatpush.bf16.msra.mxu0 %v609
        %796 = vmatmul.bf16.gmra.mxu0 %v688
        %v797 = vpop.f32.mrf.mxu0
        %v798 = vadd.f32 %v784, %v797
        %v799 = vpop.f32.mrf.mxu0
        %v800 = vadd.f32 %v786, %v799
        %801 = vdwg.mxu0
        %802 = vmatpush.bf16.msra.mxu0 %v559
        %803 = vmatpush.bf16.msra.mxu0 %v556
        %804 = vmatpush.bf16.msra.mxu0 %v553
        %805 = vmatpush.bf16.msra.mxu0 %v550
        %806 = vmatpush.bf16.msra.mxu0 %v547
        %807 = vmatpush.bf16.msra.mxu0 %v544
        %808 = vmatpush.bf16.msra.mxu0 %v541
        %809 = vmatpush.bf16.msra.mxu0 %v538
        %810 = vmatmul.bf16.gmra.mxu0 %v279
        %v811 = vpop.f32.mrf.mxu0
        %v812 = vadd.f32 0.0, %v811
        %v813 = vpop.f32.mrf.mxu0
        %v814 = vadd.f32 0.0, %v813
        %815 = vdwg.mxu0
        %816 = vmatpush.bf16.msra.mxu0 %v583
        %817 = vmatpush.bf16.msra.mxu0 %v580
        %818 = vmatpush.bf16.msra.mxu0 %v577
        %819 = vmatpush.bf16.msra.mxu0 %v574
        %820 = vmatpush.bf16.msra.mxu0 %v571
        %821 = vmatpush.bf16.msra.mxu0 %v568
        %822 = vmatpush.bf16.msra.mxu0 %v565
        %823 = vmatpush.bf16.msra.mxu0 %v562
        %824 = vmatmul.bf16.gmra.mxu0 %v280
        %v825 = vpop.f32.mrf.mxu0
        %v826 = vadd.f32 %v812, %v825
        %v827 = vpop.f32.mrf.mxu0
        %v828 = vadd.f32 %v814, %v827
        %829 = vdwg.mxu0
        %830 = vmatpush.bf16.msra.mxu0 %v607
        %831 = vmatpush.bf16.msra.mxu0 %v604
        %832 = vmatpush.bf16.msra.mxu0 %v601
        %833 = vmatpush.bf16.msra.mxu0 %v598
        %834 = vmatpush.bf16.msra.mxu0 %v595
        %835 = vmatpush.bf16.msra.mxu0 %v592
        %836 = vmatpush.bf16.msra.mxu0 %v589
        %837 = vmatpush.bf16.msra.mxu0 %v586
        %838 = vmatmul.bf16.gmra.mxu0 %v281
        %v839 = vpop.f32.mrf.mxu0
        %v840 = vadd.f32 %v826, %v839
        %v841 = vpop.f32.mrf.mxu0
        %v842 = vadd.f32 %v828, %v841
        %843 = vdwg.mxu0
        %844 = vmatpush.bf16.msra.mxu0 0
        %845 = vmatpush.bf16.msra.mxu0 0
        %846 = vmatpush.bf16.msra.mxu0 0
        %847 = vmatpush.bf16.msra.mxu0 0
        %848 = vmatpush.bf16.msra.mxu0 0
        %849 = vmatpush.bf16.msra.mxu0 0
        %850 = vmatpush.bf16.msra.mxu0 0
        %851 = vmatpush.bf16.msra.mxu0 %v610
        %852 = vmatmul.bf16.gmra.mxu0 %v688
        %v853 = vpop.f32.mrf.mxu0
        %v854 = vadd.f32 %v840, %v853
        %v855 = vpop.f32.mrf.mxu0
        %v856 = vadd.f32 %v842, %v855
        %857 = vdwg.mxu0
        %858 = vst [vmem:[%s159] sm:$0xff] %v742
        %859 = vst [vmem:[%s159 + $0x8] sm:$0xff] %v798
        %860 = vst [vmem:[%s159 + $0x10] sm:$0xff] %v854
        %861 = vst [vmem:[%s159 + $0x18] sm:$0xff] %v744
        %862 = vst [vmem:[%s159 + $0x20] sm:$0xff] %v800
        %863 = vst [vmem:[%s159 + $0x28] sm:$0xff] %v856
        %s864 = sand.u32 %s71, 1
        %s865 = sand.u32 %s71, 1
        %s866 = smul.addr %s865, 48
        %s867 = scalar_lea.vmem [#allocation4], %s866
        // Predicated region
        $region33: #{psf_forward.1} parent=27 // pred_check
          %p868 = pneg %p81
        $region34: #{psf_forward.1} parent=27 // pred_check_branch
          %870 = sbr.rel (%p868) target = $region36
        $region35: #{psf_forward.1} parent=27 // pred_region
          %s871 = smul.u32 3, %s16
          %s872 = smul.addr %s871, 8
          %s873 = scalar_lea.vmem %s2, %s872
          // Predicated region
          $region37: #{psf_forward.1} parent=35 // pred_check
            _
          $region38: #{psf_forward.1} parent=35 // pred_check_branch
            %875 = sbr.rel (0) target = $region40
          $region39: #{psf_forward.1} parent=35 // pred_region
            // Predicated region
            $region41: #{psf_forward.1} parent=39 // pred_check
              _
            $region42: #{psf_forward.1} parent=39 // pred_check_branch
              %877 = sbr.rel (0) target = $region44
            $region43: #{psf_forward.1} parent=39 // pred_region
              loop: start=0, step=1, limit=1
              $region45: #{psf_forward.1} parent=43 // loop_pre_header
                _
              $region46: #{psf_forward.1} parent=43 // loop_header
                %s879 = sphi 0, %s883
                %p880 = scmp.ge.s32.totalorder %s879, 1
                %s884 = sphi %s867, %s867
                %s885 = sphi %s873, %s873
              $region47: #{psf_forward.1} parent=43 // loop_header_branch
                %882 = sbr.rel (%p880) target = $region51
              $region48: #{psf_forward.1} parent=43 // loop_body
                %v886 = vld [vmem:[%s884] sm:$0xff]
                %887 = vst [vmem:[%s885] sm:$0xff] %v886
                %v888 = vld [vmem:[%s884 + $0x8] sm:$0xff]
                %889 = vst [vmem:[%s885 + $0x8] sm:$0xff] %v888
                %v890 = vld [vmem:[%s884 + $0x10] sm:$0xff]
                %891 = vst [vmem:[%s885 + $0x10] sm:$0xff] %v890
                %v892 = vld [vmem:[%s884 + $0x18] sm:$0xff]
                %893 = vst [vmem:[%s885 + $0x30] sm:$0xff] %v892
                %v894 = vld [vmem:[%s884 + $0x20] sm:$0xff]
                %895 = vst [vmem:[%s885 + $0x38] sm:$0xff] %v894
                %v896 = vld [vmem:[%s884 + $0x28] sm:$0xff]
                %897 = vst [vmem:[%s885 + $0x40] sm:$0xff] %v896
              $region49: #{psf_forward.1} parent=43 // loop_footer
                %s883 = sadd.s32 1, %s879
              $region50: #{psf_forward.1} parent=43 // loop_footer_branch
                %878 = sbr.rel target = $region46
              $region51: #{psf_forward.1} parent=43 // loop_exit
                _
            $region44: #{psf_forward.1} parent=39 // pred_fallthru
              _
            // Predicated region
            $region52: #{psf_forward.1} parent=39 // pred_check
              _
            $region53: #{psf_forward.1} parent=39 // pred_check_branch
              %899 = sbr.rel target = $region55
            $region54: #{psf_forward.1} parent=39 // pred_region
              _
            $region55: #{psf_forward.1} parent=39 // pred_fallthru
              _
          $region40: #{psf_forward.1} parent=35 // pred_fallthru
            _
          %900 = vnop
        $region36: #{psf_forward.1} parent=27 // pred_fallthru
          _
      $region28: #{psf_forward.1} parent=5 // pred_fallthru
        _
      %p901 = scmp.le.s32.totalorder 2, %s11
      // Predicated region
      $region56: #{psf_forward.1} parent=5 // pred_check
        %p902 = pneg %p901
      $region57: #{psf_forward.1} parent=5 // pred_check_branch
        %904 = sbr.rel (%p902) target = $region59
      $region58: #{psf_forward.1} parent=5 // pred_region
        %s905 = ssub.s32 %s11, 2
        // Predicated region
        $region60: #{psf_forward.1} parent=58 // pred_check
          %p906 = pneg %p87
        $region61: #{psf_forward.1} parent=58 // pred_check_branch
          %908 = sbr.rel (%p906) target = $region63
        $region62: #{psf_forward.1} parent=58 // pred_region
          %s909 = sand.u32 %s72, 1
          %s910 = sand.u32 %s72, 1
          %s911 = smul.addr %s910, 48
          %s912 = scalar_lea.vmem [#allocation4], %s911
        $region63: #{psf_forward.1} parent=58 // pred_fallthru
          _
      $region59: #{psf_forward.1} parent=5 // pred_fallthru
        _
    $region6: #{psf_forward.1} parent=1 // loop_footer
      %s15 = sadd.s32 1, %s11
    $region7: #{psf_forward.1} parent=1 // loop_footer_branch
      %10 = sbr.rel target = $region3
    $region8: #{psf_forward.1} parent=1 // loop_exit
      _
    %913 = vsyncpa [#allocation3], 1
    %s914 = scalar_lea.sflag [#allocation3], 1
    %915 = vsyncpa %s914, 1

</llo_original>
